<compile_context>
chip_gen: v7x
topology: tpu7x:2x2x1
jax: 0.10.0
libtpu: 0.0.40
codegen_flags: <defaults>
</compile_context>

<pallas_src>
import functools

import numpy as np

import jax
import jax.numpy as jnp
from jax.experimental import pallas as pl
from jax.experimental.pallas import tpu as pltpu

NEG_SLOPE = 0.01          # PyTorch nn.LeakyReLU default
LANES = 128               # conv output channels padded to a full lane width
MATMUL_DTYPE = jnp.bfloat16


def _leaky(y):
    return jnp.where(y > 0, y, NEG_SLOPE * y)


def conv_out_hw(hw, k, s, p):
    return (hw + 2 * p - k) // s + 1


# ---------------------------------------------------------------------------
# Fused Pallas kernel: conv1 -> conv2 -> conv3 -> dueling head (5 GEMMs)
# ---------------------------------------------------------------------------
def _fused_dueling_kernel(x1_ref, w1_ref, b1_ref, w2_ref, b2_ref, w3_ref, b3_ref,
                          wh1_ref, bh1_ref, wva_ref, bva_ref, o_ref):
    B, A = o_ref.shape
    nq = w2_ref.shape[0] // LANES          # conv1 output spatial positions (conv2 taps)
    dt = w1_ref.dtype                      # bf16 MXU operands; accumulation stays f32

    # conv1: host-im2col'd patches -> ONE GEMM.  Rows are q-major: row = q*B + b.
    a1 = _leaky(jnp.dot(x1_ref[...], w1_ref[...], preferred_element_type=jnp.float32)
                + b1_ref[...])                                          # (M1_pad, 128) f32

    # conv2 (1x1 output): gather the nq row-blocks into lane blocks -> one deep-K GEMM.
    xcol2 = jnp.concatenate([a1[q * B:(q + 1) * B, :] for q in range(nq)], axis=1)
    a2 = _leaky(jnp.dot(xcol2.astype(dt), w2_ref[...], preferred_element_type=jnp.float32)
                + b2_ref[...])                                          # (B, 128)

    # conv3 (1x1 -> 1x1; only the center tap lands in-bounds): plain GEMM.
    a3 = _leaky(jnp.dot(a2.astype(dt), w3_ref[...], preferred_element_type=jnp.float32)
                + b3_ref[...])                                          # (B, 128)

    # Dueling head: fused [value || advantage] hidden layer, then fused output layer.
    h = _leaky(jnp.dot(a3.astype(dt), wh1_ref[...], preferred_element_type=jnp.float32)
               + bh1_ref[...])                                          # (B, 512)
    out = jnp.dot(h.astype(dt), wva_ref[...],
                  preferred_element_type=jnp.float32) + bva_ref[...]    # (B, 128) padded
    v = out[:, 0:1]                                                     # value stream
    adv = out[:, 1:1 + A]                                               # advantage stream

    # PyTorch: qvals = values + (advantage - advantage.mean())  -> GLOBAL mean.
    o_ref[...] = v + (adv - jnp.mean(adv))


# ---------------------------------------------------------------------------
# Host-side (static-shape) operand construction
# ---------------------------------------------------------------------------
def prepare_operands(params, state_dim, action_dim, dtype=MATMUL_DTYPE):
    C, H, W = state_dim
    oh1, ow1 = conv_out_hw(H, 8, 4, 1), conv_out_hw(W, 8, 4, 1)
    oh2, ow2 = conv_out_hw(oh1, 5, 2, 1), conv_out_hw(ow1, 5, 2, 1)
    oh3, ow3 = conv_out_hw(oh2, 3, 1, 1), conv_out_hw(ow2, 3, 1, 1)
    assert oh2 == ow2 == 1 and oh3 == ow3 == 1, "kernel specialized to 1x1 post-conv2 spatial"
    nq = oh1 * ow1

    # conv1 -> single GEMM weight; column order matches wrapper im2col: (dkh, dkw, c_in).
    w1n = np.asarray(params["conv1_w"], np.float32)                 # (32, C, 8, 8)
    o1 = w1n.shape[0]
    w1f = np.zeros((8 * 8 * C, LANES), np.float32)
    w1f[:, :o1] = w1n.transpose(2, 3, 1, 0).reshape(8 * 8 * C, o1)
    b1f = np.zeros((1, LANES), np.float32)
    b1f[0, :o1] = np.asarray(params["conv1_b"], np.float32)

    # conv2 -> one deep-K GEMM over (tap position q, channel); padded taps dropped.
    w2n = np.asarray(params["conv2_w"], np.float32)                 # (64, 32, 5, 5)
    o2, c2, k2, _ = w2n.shape
    w2f = np.zeros((nq * LANES, LANES), np.float32)
    for dkh in range(k2):
        ih = dkh - 1                      # output position 0, stride 2, pad 1
        if not 0 <= ih < oh1:
            continue
        for dkw in range(k2):
            iw = dkw - 1
            if not 0 <= iw < ow1:
                continue
            q = ih * ow1 + iw
            w2f[q * LANES:q * LANES + c2, :o2] = w2n[:, :, dkh, dkw].T
    b2f = np.zeros((1, LANES), np.float32)
    b2f[0, :o2] = np.asarray(params["conv2_b"], np.float32)

    # conv3 -> plain GEMM (only the center 3x3 tap is in-bounds for a 1x1 input).
    w3n = np.asarray(params["conv3_w"], np.float32)                 # (64, 64, 3, 3)
    o3, c3 = w3n.shape[:2]
    w3f = np.zeros((LANES, LANES), np.float32)
    w3f[:c3, :o3] = w3n[:, :, 1, 1].T
    b3f = np.zeros((1, LANES), np.float32)
    b3f[0, :o3] = np.asarray(params["conv3_b"], np.float32)

    # Dueling head: fused value||advantage first layer, fused padded second layer.
    fc_in = o3 * oh3 * ow3
    wv1 = np.asarray(params["wv1"], np.float32)
    wa1 = np.asarray(params["wa1"], np.float32)
    assert wv1.shape[0] == fc_in
    hidden = wv1.shape[1]
    wh1 = np.zeros((LANES, 2 * hidden), np.float32)
    wh1[:fc_in, :hidden] = wv1
    wh1[:fc_in, hidden:] = wa1
    bh1 = np.concatenate([np.asarray(params["bv1"], np.float32),
                          np.asarray(params["ba1"], np.float32)]).reshape(1, 2 * hidden)
    wva = np.zeros((2 * hidden, LANES), np.float32)
    wva[:hidden, 0] = np.asarray(params["wv2"], np.float32)[:, 0]
    wva[hidden:, 1:1 + action_dim] = np.asarray(params["wa2"], np.float32)
    bva = np.zeros((1, LANES), np.float32)
    bva[0, 0] = float(np.asarray(params["bv2"], np.float32)[0])
    bva[0, 1:1 + action_dim] = np.asarray(params["ba2"], np.float32)

    f32 = jnp.float32
    return {
        "w1": jnp.asarray(w1f, dtype), "b1": jnp.asarray(b1f, f32),
        "w2": jnp.asarray(w2f, dtype), "b2": jnp.asarray(b2f, f32),
        "w3": jnp.asarray(w3f, dtype), "b3": jnp.asarray(b3f, f32),
        "wh1": jnp.asarray(wh1, dtype), "bh1": jnp.asarray(bh1, f32),
        "wva": jnp.asarray(wva, dtype), "bva": jnp.asarray(bva, f32),
    }


# ---------------------------------------------------------------------------
# Wrapper: im2col of the RAW input (not an intermediate) + the fused pallas_call
# ---------------------------------------------------------------------------
def _im2col_conv1(state, k=8, s=4, p=1):
    B, C, H, W = state.shape
    OH, OW = conv_out_hw(H, k, s, p), conv_out_hw(W, k, s, p)
    xp = jnp.pad(state, ((0, 0), (0, 0), (p, p), (p, p)))
    ih = (np.arange(OH) * s)[:, None] + np.arange(k)[None, :]      # static (OH, k)
    iw = (np.arange(OW) * s)[:, None] + np.arange(k)[None, :]      # static (OW, k)
    t = xp[:, :, ih, :]                    # (B, C, OH, k, W+2p)
    t = t[:, :, :, :, iw]                  # (B, C, OH, k, OW, k)
    t = t.transpose(2, 4, 0, 3, 5, 1)      # (OH, OW, B, dkh, dkw, C) -> rows q-major
    return t.reshape(OH * OW * B, k * k * C)   # row = q*B + b, col = (dkh*k+dkw)*C + c


@functools.partial(jax.jit, static_argnames=("action_dim",))
def dueling_forward(prep, state, *, action_dim):
    B = state.shape[0]
    x1 = _im2col_conv1(state).astype(MATMUL_DTYPE)
    m_pad = -x1.shape[0] % 8               # pad patch rows to a sublane multiple (never read)
    if m_pad:
        x1 = jnp.pad(x1, ((0, m_pad), (0, 0)))
    n_in = 11
    return pl.pallas_call(
        _fused_dueling_kernel,
        out_shape=jax.ShapeDtypeStruct((B, action_dim), jnp.float32),
        in_specs=[pl.BlockSpec(memory_space=pltpu.MemorySpace.VMEM)] * n_in,
        out_specs=pl.BlockSpec(memory_space=pltpu.MemorySpace.VMEM),
        compiler_params=pltpu.CompilerParams(vmem_limit_bytes=32 * 1024 * 1024),
    )(x1, prep["w1"], prep["b1"], prep["w2"], prep["b2"], prep["w3"], prep["b3"],
      prep["wh1"], prep["bh1"], prep["wva"], prep["bva"])


# ---------------------------------------------------------------------------
# Parameter init (matches the PyTorch module's layer shapes; max_action unused in forward)
# ---------------------------------------------------------------------------
def init_params(key, state_dim, action_dim):
    C, H, W = state_dim
    h1, w1 = conv_out_hw(H, 8, 4, 1), conv_out_hw(W, 8, 4, 1)
    h2, w2 = conv_out_hw(h1, 5, 2, 1), conv_out_hw(w1, 5, 2, 1)
    h3, w3 = conv_out_hw(h2, 3, 1, 1), conv_out_hw(w2, 3, 1, 1)
    fc_in = 64 * h3 * w3

    ks = jax.random.split(key, 8)

    def w_init(k, shape, fan_in):
        return (jax.random.normal(k, shape, jnp.float32) / jnp.sqrt(fan_in)).astype(jnp.float32)

    params = {
        "conv1_w": w_init(ks[0], (32, C, 8, 8), C * 64),
        "conv1_b": jnp.linspace(-0.1, 0.1, 32, dtype=jnp.float32),
        "conv2_w": w_init(ks[1], (64, 32, 5, 5), 32 * 25),
        "conv2_b": jnp.linspace(-0.1, 0.1, 64, dtype=jnp.float32),
        "conv3_w": w_init(ks[2], (64, 64, 3, 3), 64 * 9),
        "conv3_b": jnp.linspace(-0.05, 0.05, 64, dtype=jnp.float32),
        "wv1": w_init(ks[3], (fc_in, 256), fc_in),
        "bv1": jnp.linspace(-0.1, 0.1, 256, dtype=jnp.float32),
        "wv2": w_init(ks[4], (256, 1), 256),
        "bv2": jnp.array([0.05], dtype=jnp.float32),
        "wa1": w_init(ks[5], (fc_in, 256), fc_in),
        "ba1": jnp.linspace(-0.1, 0.1, 256, dtype=jnp.float32),
        "wa2": w_init(ks[6], (256, action_dim), 256),
        "ba2": jnp.linspace(-0.1, 0.1, action_dim, dtype=jnp.float32),
    }
    return params, fc_in


# ---------------------------------------------------------------------------
# Pure-JAX f32 reference (numerical cross-check only)
# ---------------------------------------------------------------------------
def reference_forward(params, state):
    def conv(x, w, b, s, p):
        y = jax.lax.conv_general_dilated(
            x, w, (s, s), [(p, p), (p, p)],
            dimension_numbers=("NCHW", "OIHW", "NCHW"))
        return _leaky(y + b[None, :, None, None])

    x = conv(state, params["conv1_w"], params["conv1_b"], 4, 1)
    x = conv(x, params["conv2_w"], params["conv2_b"], 2, 1)
    x = conv(x, params["conv3_w"], params["conv3_b"], 1, 1)
    feat = x.reshape(x.shape[0], -1)
    hv = _leaky(feat @ params["wv1"] + params["bv1"])
    v = hv @ params["wv2"] + params["bv2"]
    ha = _leaky(feat @ params["wa1"] + params["ba1"])
    adv = ha @ params["wa2"] + params["ba2"]
    return v + (adv - jnp.mean(adv))      # torch: advantage.mean() is a GLOBAL mean


if __name__ == "__main__":
    state_dim = (4, 16, 16)   # (C, H, W)
    action_dim = 6
    batch = 2

    key = jax.random.PRNGKey(0)
    pkey, xkey = jax.random.split(key)
    params, fc_in = init_params(pkey, state_dim, action_dim)
    state = jax.random.normal(xkey, (batch,) + state_dim, dtype=jnp.float32)

    prep = prepare_operands(params, state_dim, action_dim)

    qvals = jax.block_until_ready(dueling_forward(prep, state, action_dim=action_dim))
    ref = jax.block_until_ready(reference_forward(params, state))

    assert qvals.shape == (batch, action_dim)
    # bf16 MXU operands with f32 accumulation -> loosened tolerance vs. f32 reference.
    assert jnp.allclose(qvals, ref, atol=5e-2, rtol=5e-2), (qvals, ref)
    print("KERNEL_OK")
</pallas_src>

<mosaic_0001>
module attributes {stable_mosaic.version = 11 : i64} {
  func.func @_fused_dueling_kernel(%arg0: memref<24x256xbf16, #tpu.memory_space<vmem>>, %arg1: memref<256x128xbf16, #tpu.memory_space<vmem>>, %arg2: memref<1x128xf32, #tpu.memory_space<vmem>>, %arg3: memref<1152x128xbf16, #tpu.memory_space<vmem>>, %arg4: memref<1x128xf32, #tpu.memory_space<vmem>>, %arg5: memref<128x128xbf16, #tpu.memory_space<vmem>>, %arg6: memref<1x128xf32, #tpu.memory_space<vmem>>, %arg7: memref<128x512xbf16, #tpu.memory_space<vmem>>, %arg8: memref<1x512xf32, #tpu.memory_space<vmem>>, %arg9: memref<512x128xbf16, #tpu.memory_space<vmem>>, %arg10: memref<1x128xf32, #tpu.memory_space<vmem>>, %arg11: memref<2x6xf32, #tpu.memory_space<vmem>>) attributes {dimension_semantics = [], scalar_prefetch = 0 : i64, scratch_operands = 0 : i64, tpu.core_type = #tpu.core_type<tc>} {
    %c0 = arith.constant 0 : index
    %c0_0 = arith.constant 0 : index
    %0 = vector.load %arg0[%c0, %c0_0] : memref<24x256xbf16, #tpu.memory_space<vmem>>, vector<24x256xbf16>
    %c0_1 = arith.constant 0 : index
    %c0_2 = arith.constant 0 : index
    %1 = vector.load %arg1[%c0_1, %c0_2] : memref<256x128xbf16, #tpu.memory_space<vmem>>, vector<256x128xbf16>
    %cst = arith.constant dense<0.000000e+00> : vector<24x128xf32>
    %2 = tpu.matmul %0, %1, %cst {dimension_numbers = #tpu.dot_dimension_numbers<[1], [0], [0], [1], [0, 0, 1, 1], [], []>} : vector<24x256xbf16>, vector<256x128xbf16>, vector<24x128xf32> -> vector<24x128xf32>
    %c0_3 = arith.constant 0 : index
    %c0_4 = arith.constant 0 : index
    %3 = vector.load %arg2[%c0_3, %c0_4] : memref<1x128xf32, #tpu.memory_space<vmem>>, vector<1x128xf32>
    %4 = vector.broadcast %3 : vector<1x128xf32> to vector<24x128xf32>
    %5 = arith.addf %2, %4 : vector<24x128xf32>
    %cst_5 = arith.constant 0.000000e+00 : f32
    %6 = vector.broadcast %cst_5 : f32 to vector<24x128xf32>
    %7 = arith.cmpf ogt, %5, %6 : vector<24x128xf32>
    %cst_6 = arith.constant 0.00999999977 : f32
    %8 = vector.broadcast %cst_6 : f32 to vector<24x128xf32>
    %9 = arith.mulf %8, %5 : vector<24x128xf32>
    %10 = arith.select %7, %5, %9 : vector<24x128xi1>, vector<24x128xf32>
    %11 = vector.extract_strided_slice %10 {offsets = [0, 0], sizes = [2, 128], strides = [1, 1]} : vector<24x128xf32> to vector<2x128xf32>
    %12 = vector.extract_strided_slice %10 {offsets = [2, 0], sizes = [2, 128], strides = [1, 1]} : vector<24x128xf32> to vector<2x128xf32>
    %13 = vector.extract_strided_slice %10 {offsets = [4, 0], sizes = [2, 128], strides = [1, 1]} : vector<24x128xf32> to vector<2x128xf32>
    %14 = vector.extract_strided_slice %10 {offsets = [6, 0], sizes = [2, 128], strides = [1, 1]} : vector<24x128xf32> to vector<2x128xf32>
    %15 = vector.extract_strided_slice %10 {offsets = [8, 0], sizes = [2, 128], strides = [1, 1]} : vector<24x128xf32> to vector<2x128xf32>
    %16 = vector.extract_strided_slice %10 {offsets = [10, 0], sizes = [2, 128], strides = [1, 1]} : vector<24x128xf32> to vector<2x128xf32>
    %17 = vector.extract_strided_slice %10 {offsets = [12, 0], sizes = [2, 128], strides = [1, 1]} : vector<24x128xf32> to vector<2x128xf32>
    %18 = vector.extract_strided_slice %10 {offsets = [14, 0], sizes = [2, 128], strides = [1, 1]} : vector<24x128xf32> to vector<2x128xf32>
    %19 = vector.extract_strided_slice %10 {offsets = [16, 0], sizes = [2, 128], strides = [1, 1]} : vector<24x128xf32> to vector<2x128xf32>
    %20 = tpu.concatenate %11, %12, %13, %14, %15, %16, %17, %18, %19 in 1 : vector<2x128xf32>, vector<2x128xf32>, vector<2x128xf32>, vector<2x128xf32>, vector<2x128xf32>, vector<2x128xf32>, vector<2x128xf32>, vector<2x128xf32>, vector<2x128xf32> -> vector<2x1152xf32>
    %21 = arith.truncf %20 : vector<2x1152xf32> to vector<2x1152xbf16>
    %c0_7 = arith.constant 0 : index
    %c0_8 = arith.constant 0 : index
    %22 = vector.load %arg3[%c0_7, %c0_8] : memref<1152x128xbf16, #tpu.memory_space<vmem>>, vector<1152x128xbf16>
    %cst_9 = arith.constant dense<0.000000e+00> : vector<2x128xf32>
    %23 = tpu.matmul %21, %22, %cst_9 {dimension_numbers = #tpu.dot_dimension_numbers<[1], [0], [0], [1], [0, 0, 1, 1], [], []>} : vector<2x1152xbf16>, vector<1152x128xbf16>, vector<2x128xf32> -> vector<2x128xf32>
    %c0_10 = arith.constant 0 : index
    %c0_11 = arith.constant 0 : index
    %24 = vector.load %arg4[%c0_10, %c0_11] : memref<1x128xf32, #tpu.memory_space<vmem>>, vector<1x128xf32>
    %25 = vector.broadcast %24 : vector<1x128xf32> to vector<2x128xf32>
    %26 = arith.addf %23, %25 : vector<2x128xf32>
    %cst_12 = arith.constant 0.000000e+00 : f32
    %27 = vector.broadcast %cst_12 : f32 to vector<2x128xf32>
    %28 = arith.cmpf ogt, %26, %27 : vector<2x128xf32>
    %cst_13 = arith.constant 0.00999999977 : f32
    %29 = vector.broadcast %cst_13 : f32 to vector<2x128xf32>
    %30 = arith.mulf %29, %26 : vector<2x128xf32>
    %31 = arith.select %28, %26, %30 : vector<2x128xi1>, vector<2x128xf32>
    %32 = arith.truncf %31 : vector<2x128xf32> to vector<2x128xbf16>
    %c0_14 = arith.constant 0 : index
    %c0_15 = arith.constant 0 : index
    %33 = vector.load %arg5[%c0_14, %c0_15] : memref<128x128xbf16, #tpu.memory_space<vmem>>, vector<128x128xbf16>
    %cst_16 = arith.constant dense<0.000000e+00> : vector<2x128xf32>
    %34 = tpu.matmul %32, %33, %cst_16 {dimension_numbers = #tpu.dot_dimension_numbers<[1], [0], [0], [1], [0, 0, 1, 1], [], []>} : vector<2x128xbf16>, vector<128x128xbf16>, vector<2x128xf32> -> vector<2x128xf32>
    %c0_17 = arith.constant 0 : index
    %c0_18 = arith.constant 0 : index
    %35 = vector.load %arg6[%c0_17, %c0_18] : memref<1x128xf32, #tpu.memory_space<vmem>>, vector<1x128xf32>
    %36 = vector.broadcast %35 : vector<1x128xf32> to vector<2x128xf32>
    %37 = arith.addf %34, %36 : vector<2x128xf32>
    %cst_19 = arith.constant 0.000000e+00 : f32
    %38 = vector.broadcast %cst_19 : f32 to vector<2x128xf32>
    %39 = arith.cmpf ogt, %37, %38 : vector<2x128xf32>
    %cst_20 = arith.constant 0.00999999977 : f32
    %40 = vector.broadcast %cst_20 : f32 to vector<2x128xf32>
    %41 = arith.mulf %40, %37 : vector<2x128xf32>
    %42 = arith.select %39, %37, %41 : vector<2x128xi1>, vector<2x128xf32>
    %43 = arith.truncf %42 : vector<2x128xf32> to vector<2x128xbf16>
    %c0_21 = arith.constant 0 : index
    %c0_22 = arith.constant 0 : index
    %44 = vector.load %arg7[%c0_21, %c0_22] : memref<128x512xbf16, #tpu.memory_space<vmem>>, vector<128x512xbf16>
    %cst_23 = arith.constant dense<0.000000e+00> : vector<2x512xf32>
    %45 = tpu.matmul %43, %44, %cst_23 {dimension_numbers = #tpu.dot_dimension_numbers<[1], [0], [0], [1], [0, 0, 1, 1], [], []>} : vector<2x128xbf16>, vector<128x512xbf16>, vector<2x512xf32> -> vector<2x512xf32>
    %c0_24 = arith.constant 0 : index
    %c0_25 = arith.constant 0 : index
    %46 = vector.load %arg8[%c0_24, %c0_25] : memref<1x512xf32, #tpu.memory_space<vmem>>, vector<1x512xf32>
    %47 = vector.broadcast %46 : vector<1x512xf32> to vector<2x512xf32>
    %48 = arith.addf %45, %47 : vector<2x512xf32>
    %cst_26 = arith.constant 0.000000e+00 : f32
    %49 = vector.broadcast %cst_26 : f32 to vector<2x512xf32>
    %50 = arith.cmpf ogt, %48, %49 : vector<2x512xf32>
    %cst_27 = arith.constant 0.00999999977 : f32
    %51 = vector.broadcast %cst_27 : f32 to vector<2x512xf32>
    %52 = arith.mulf %51, %48 : vector<2x512xf32>
    %53 = arith.select %50, %48, %52 : vector<2x512xi1>, vector<2x512xf32>
    %54 = arith.truncf %53 : vector<2x512xf32> to vector<2x512xbf16>
    %c0_28 = arith.constant 0 : index
    %c0_29 = arith.constant 0 : index
    %55 = vector.load %arg9[%c0_28, %c0_29] : memref<512x128xbf16, #tpu.memory_space<vmem>>, vector<512x128xbf16>
    %cst_30 = arith.constant dense<0.000000e+00> : vector<2x128xf32>
    %56 = tpu.matmul %54, %55, %cst_30 {dimension_numbers = #tpu.dot_dimension_numbers<[1], [0], [0], [1], [0, 0, 1, 1], [], []>} : vector<2x512xbf16>, vector<512x128xbf16>, vector<2x128xf32> -> vector<2x128xf32>
    %c0_31 = arith.constant 0 : index
    %c0_32 = arith.constant 0 : index
    %57 = vector.load %arg10[%c0_31, %c0_32] : memref<1x128xf32, #tpu.memory_space<vmem>>, vector<1x128xf32>
    %58 = vector.broadcast %57 : vector<1x128xf32> to vector<2x128xf32>
    %59 = arith.addf %56, %58 : vector<2x128xf32>
    %60 = vector.extract_strided_slice %59 {offsets = [0, 0], sizes = [2, 1], strides = [1, 1]} : vector<2x128xf32> to vector<2x1xf32>
    %61 = vector.extract_strided_slice %59 {offsets = [0, 1], sizes = [2, 6], strides = [1, 1]} : vector<2x128xf32> to vector<2x6xf32>
    %62 = vector.shape_cast %61 : vector<2x6xf32> to vector<1x2x6xf32>
    %cst_33 = arith.constant dense<0.000000e+00> : vector<1xf32>
    %63 = vector.multi_reduction <add>, %62, %cst_33 [1, 2] : vector<1x2x6xf32> to vector<1xf32>
    %64 = vector.shape_cast %63 : vector<1xf32> to vector<1x1x1xf32>
    %65 = vector.extract %64[0, 0, 0] : f32 from vector<1x1x1xf32>
    %cst_34 = arith.constant 1.200000e+01 : f32
    %66 = arith.divf %65, %cst_34 : f32
    %67 = vector.broadcast %66 : f32 to vector<2x6xf32>
    %68 = arith.subf %61, %67 : vector<2x6xf32>
    %69 = vector.broadcast %60 : vector<2x1xf32> to vector<2x6xf32>
    %70 = arith.addf %69, %68 : vector<2x6xf32>
    %c0_35 = arith.constant 0 : index
    %c0_36 = arith.constant 0 : index
    %71 = vector.load %arg11[%c0_35, %c0_36] : memref<2x6xf32, #tpu.memory_space<vmem>>, vector<2x6xf32>
    tpu.vector_store %arg11[%c0_35, %c0_36], %70 {strides = array<i32>} : memref<2x6xf32, #tpu.memory_space<vmem>>, vector<2x6xf32>,
    return
  }
}

</mosaic_0001>

<llo_original>
// kernel: dueling_forward.1
$region0: #{dueling_forward.1}
  #allocation0 [shape = 'u32[]', space=smem, size = 0x4, offset = 0x4, fixed_abs, tag = 'smem constant byte address 0x4 - core index']
  #allocation1 [shape = 'u32[144,128]{1,0:T(1,128)}', space=vmem, size = 0x12000, scoped, tag = 'internal scratch']
  %s0 = inlined_call_operand.vmem [shape: bf16[24,256], index: 0, kind: input, shape index: {}]
  %s1 = inlined_call_operand.vmem [shape: bf16[256,128], index: 1, kind: input, shape index: {}]
  %s2 = inlined_call_operand.vmem [shape: f32[1,128], index: 2, kind: input, shape index: {}]
  %s3 = inlined_call_operand.vmem [shape: bf16[1152,128], index: 3, kind: input, shape index: {}]
  %s4 = inlined_call_operand.vmem [shape: f32[1,128], index: 4, kind: input, shape index: {}]
  %s5 = inlined_call_operand.vmem [shape: bf16[128,128], index: 5, kind: input, shape index: {}]
  %s6 = inlined_call_operand.vmem [shape: f32[1,128], index: 6, kind: input, shape index: {}]
  %s7 = inlined_call_operand.vmem [shape: bf16[128,512], index: 7, kind: input, shape index: {}]
  %s8 = inlined_call_operand.vmem [shape: f32[1,512], index: 8, kind: input, shape index: {}]
  %s9 = inlined_call_operand.vmem [shape: bf16[512,128], index: 9, kind: input, shape index: {}]
  %s10 = inlined_call_operand.vmem [shape: f32[1,128], index: 10, kind: input, shape index: {}]
  %s11 = inlined_call_operand.hbm [shape: f32[2,6], index: 11, kind: output, shape index: {}]
  %s12 = sld [smem:[#allocation0]]
  $region54: #{dueling_forward.1} parent=0
    _
  %s14 = ssub.s32 1, %s12
  %s15 = scalar_select 0, %s14, %s12
  $region1: #{dueling_forward.1} parent=0
    #allocation2 [shape = 'u8[1024]{0}', space=vmem, size = 0x400, scoped, tag = 'output window, operand 0, single buffered']
    #allocation3 [shape = 's32[1]{0}', space=sflag, size = 0x4, scoped, tag = 'scoped memory for dueling_forward.1']
    %16 = vsyncpa [#allocation3], 0
    // Predicated region
    $region2: #{dueling_forward.1} parent=1 // pred_check
      _
    $region3: #{dueling_forward.1} parent=1 // pred_check_branch
      %18 = sbr.rel (0) target = $region5
    $region4: #{dueling_forward.1} parent=1 // pred_region
      _
    $region5: #{dueling_forward.1} parent=1 // pred_fallthru
      _
    // Predicated region
    $region6: #{dueling_forward.1} parent=1 // pred_check
      _
    $region7: #{dueling_forward.1} parent=1 // pred_check_branch
      %20 = sbr.rel (0) target = $region9
    $region8: #{dueling_forward.1} parent=1 // pred_region
      _
    $region9: #{dueling_forward.1} parent=1 // pred_fallthru
      _
    // Predicated region
    $region10: #{dueling_forward.1} parent=1 // pred_check
      _
    $region11: #{dueling_forward.1} parent=1 // pred_check_branch
      %22 = sbr.rel (0) target = $region13
    $region12: #{dueling_forward.1} parent=1 // pred_region
      _
    $region13: #{dueling_forward.1} parent=1 // pred_fallthru
      _
    // Predicated region
    $region14: #{dueling_forward.1} parent=1 // pred_check
      _
    $region15: #{dueling_forward.1} parent=1 // pred_check_branch
      %24 = sbr.rel (0) target = $region17
    $region16: #{dueling_forward.1} parent=1 // pred_region
      _
    $region17: #{dueling_forward.1} parent=1 // pred_fallthru
      _
    // Predicated region
    $region18: #{dueling_forward.1} parent=1 // pred_check
      _
    $region19: #{dueling_forward.1} parent=1 // pred_check_branch
      %26 = sbr.rel (0) target = $region21
    $region20: #{dueling_forward.1} parent=1 // pred_region
      _
    $region21: #{dueling_forward.1} parent=1 // pred_fallthru
      _
    // Predicated region
    $region22: #{dueling_forward.1} parent=1 // pred_check
      _
    $region23: #{dueling_forward.1} parent=1 // pred_check_branch
      %28 = sbr.rel (0) target = $region25
    $region24: #{dueling_forward.1} parent=1 // pred_region
      _
    $region25: #{dueling_forward.1} parent=1 // pred_fallthru
      _
    // Predicated region
    $region26: #{dueling_forward.1} parent=1 // pred_check
      _
    $region27: #{dueling_forward.1} parent=1 // pred_check_branch
      %30 = sbr.rel (0) target = $region29
    $region28: #{dueling_forward.1} parent=1 // pred_region
      _
    $region29: #{dueling_forward.1} parent=1 // pred_fallthru
      _
    // Predicated region
    $region30: #{dueling_forward.1} parent=1 // pred_check
      _
    $region31: #{dueling_forward.1} parent=1 // pred_check_branch
      %32 = sbr.rel (0) target = $region33
    $region32: #{dueling_forward.1} parent=1 // pred_region
      _
    $region33: #{dueling_forward.1} parent=1 // pred_fallthru
      _
    // Predicated region
    $region34: #{dueling_forward.1} parent=1 // pred_check
      _
    $region35: #{dueling_forward.1} parent=1 // pred_check_branch
      %34 = sbr.rel (0) target = $region37
    $region36: #{dueling_forward.1} parent=1 // pred_region
      _
    $region37: #{dueling_forward.1} parent=1 // pred_fallthru
      _
    // Predicated region
    $region38: #{dueling_forward.1} parent=1 // pred_check
      _
    $region39: #{dueling_forward.1} parent=1 // pred_check_branch
      %36 = sbr.rel (0) target = $region41
    $region40: #{dueling_forward.1} parent=1 // pred_region
      _
    $region41: #{dueling_forward.1} parent=1 // pred_fallthru
      _
    // Predicated region
    $region42: #{dueling_forward.1} parent=1 // pred_check
      _
    $region43: #{dueling_forward.1} parent=1 // pred_check_branch
      %38 = sbr.rel (0) target = $region45
    $region44: #{dueling_forward.1} parent=1 // pred_region
      _
    $region45: #{dueling_forward.1} parent=1 // pred_fallthru
      _
    %v40 = vld [vmem:[%s0] sm:$0xff]
    %v41 = vld [vmem:[%s0 + $0x8] sm:$0xff]
    %v42 = vld [vmem:[%s0 + $0x10] sm:$0xff]
    %v43 = vld [vmem:[%s1] sm:$0xf]
    %v44 = vld [vmem:[%s1 + $0x4] sm:$0xf]
    %v45 = vld [vmem:[%s1 + $0x8] sm:$0xf]
    %v46 = vld [vmem:[%s1 + $0xc] sm:$0xf]
    %v47 = vld [vmem:[%s1 + $0x10] sm:$0xf]
    %v48 = vld [vmem:[%s1 + $0x14] sm:$0xf]
    %v49 = vld [vmem:[%s1 + $0x18] sm:$0xf]
    %v50 = vld [vmem:[%s1 + $0x1c] sm:$0xf]
    %v51 = vld [vmem:[%s1 + $0x20] sm:$0xf]
    %v52 = vld [vmem:[%s1 + $0x24] sm:$0xf]
    %v53 = vld [vmem:[%s1 + $0x28] sm:$0xf]
    %v54 = vld [vmem:[%s1 + $0x2c] sm:$0xf]
    %v55 = vld [vmem:[%s1 + $0x30] sm:$0xf]
    %v56 = vld [vmem:[%s1 + $0x34] sm:$0xf]
    %v57 = vld [vmem:[%s1 + $0x38] sm:$0xf]
    %v58 = vld [vmem:[%s1 + $0x3c] sm:$0xf]
    %v59 = vld [vmem:[%s1 + $0x40] sm:$0xf]
    %v60 = vld [vmem:[%s1 + $0x44] sm:$0xf]
    %v61 = vld [vmem:[%s1 + $0x48] sm:$0xf]
    %v62 = vld [vmem:[%s1 + $0x4c] sm:$0xf]
    %v63 = vld [vmem:[%s1 + $0x50] sm:$0xf]
    %v64 = vld [vmem:[%s1 + $0x54] sm:$0xf]
    %v65 = vld [vmem:[%s1 + $0x58] sm:$0xf]
    %v66 = vld [vmem:[%s1 + $0x5c] sm:$0xf]
    %v67 = vld [vmem:[%s1 + $0x60] sm:$0xf]
    %v68 = vld [vmem:[%s1 + $0x64] sm:$0xf]
    %v69 = vld [vmem:[%s1 + $0x68] sm:$0xf]
    %v70 = vld [vmem:[%s1 + $0x6c] sm:$0xf]
    %v71 = vld [vmem:[%s1 + $0x70] sm:$0xf]
    %v72 = vld [vmem:[%s1 + $0x74] sm:$0xf]
    %v73 = vld [vmem:[%s1 + $0x78] sm:$0xf]
    %v74 = vld [vmem:[%s1 + $0x7c] sm:$0xf]
    %v75 = vld [vmem:[%s2] sm:$0x1]
    %v77 = vlaneseq
    %v78 = vshrl.u32 %v77, 7
    %v79 = vsub.s32 0, %v78
    %v80 = vrot.slane %v75, %v79
    %v85 = vunpack.c.l.b16 %v40
    %v86 = vunpack.c.h.b16 %v40
    %v87 = vunpack.c.l.b16 %v41
    %v88 = vunpack.c.h.b16 %v41
    %v89 = vunpack.c.l.b16 %v42
    %v90 = vunpack.c.h.b16 %v42
    %v91 = vpack.c.b16 %v87, %v85
    %v92 = vpack.c.b16 %v88, %v86
    %v93 = vpack.c.b16 %v89, %v89
    %v94 = vpack.c.b16 %v90, %v90
    %v131 = vunpack.c.l.b16 %v43
    %v132 = vunpack.c.l.b16 %v44
    %v133 = vunpack.c.l.b16 %v45
    %v134 = vunpack.c.l.b16 %v46
    %v135 = vunpack.c.l.b16 %v47
    %v136 = vunpack.c.l.b16 %v48
    %v137 = vunpack.c.l.b16 %v49
    %v138 = vunpack.c.l.b16 %v50
    %v139 = vunpack.c.l.b16 %v51
    %v140 = vunpack.c.l.b16 %v52
    %v141 = vunpack.c.l.b16 %v53
    %v142 = vunpack.c.l.b16 %v54
    %v143 = vunpack.c.l.b16 %v55
    %v144 = vunpack.c.l.b16 %v56
    %v145 = vunpack.c.l.b16 %v57
    %v146 = vunpack.c.l.b16 %v58
    %v147 = vunpack.c.l.b16 %v59
    %v148 = vunpack.c.l.b16 %v60
    %v149 = vunpack.c.l.b16 %v61
    %v150 = vunpack.c.l.b16 %v62
    %v151 = vunpack.c.l.b16 %v63
    %v152 = vunpack.c.l.b16 %v64
    %v153 = vunpack.c.l.b16 %v65
    %v154 = vunpack.c.l.b16 %v66
    %v155 = vunpack.c.l.b16 %v67
    %v156 = vunpack.c.l.b16 %v68
    %v157 = vunpack.c.l.b16 %v69
    %v158 = vunpack.c.l.b16 %v70
    %v159 = vunpack.c.l.b16 %v71
    %v160 = vunpack.c.l.b16 %v72
    %v161 = vunpack.c.l.b16 %v73
    %v162 = vunpack.c.l.b16 %v74
    %v163 = vpack.c.b16 %v132, %v131
    %v164 = vpack.c.b16 %v134, %v133
    %v165 = vpack.c.b16 %v136, %v135
    %v166 = vpack.c.b16 %v138, %v137
    %v167 = vpack.c.b16 %v140, %v139
    %v168 = vpack.c.b16 %v142, %v141
    %v169 = vpack.c.b16 %v144, %v143
    %v170 = vpack.c.b16 %v146, %v145
    %v171 = vpack.c.b16 %v148, %v147
    %v172 = vpack.c.b16 %v150, %v149
    %v173 = vpack.c.b16 %v152, %v151
    %v174 = vpack.c.b16 %v154, %v153
    %v175 = vpack.c.b16 %v156, %v155
    %v176 = vpack.c.b16 %v158, %v157
    %v177 = vpack.c.b16 %v160, %v159
    %v178 = vpack.c.b16 %v162, %v161
    %195 = vmatprep.subr.bf16.mxu0 0
    %196 = vmatpush1.bf16.msra.mxu0 %v163
    %197 = vmatprep.subr.bf16.mxu0 0
    %198 = vmatpush1.bf16.msra.mxu0 %v164
    %199 = vmatprep.subr.bf16.mxu0 0
    %200 = vmatpush1.bf16.msra.mxu0 %v165
    %201 = vmatprep.subr.bf16.mxu0 0
    %202 = vmatpush1.bf16.msra.mxu0 %v166
    %203 = vmatprep.subr.bf16.mxu0 0
    %204 = vmatpush1.bf16.msra.mxu0 %v167
    %205 = vmatprep.subr.bf16.mxu0 0
    %206 = vmatpush1.bf16.msra.mxu0 %v168
    %207 = vmatprep.subr.bf16.mxu0 0
    %208 = vmatpush1.bf16.msra.mxu0 %v169
    %209 = vmatprep.subr.bf16.mxu0 0
    %210 = vmatpush1.bf16.msra.mxu0 %v170
    %211 = vmatprep.subr.bf16.mxu0 0
    %212 = vmatpush1.bf16.msra.mxu0 %v171
    %213 = vmatprep.subr.bf16.mxu0 0
    %214 = vmatpush1.bf16.msra.mxu0 %v172
    %215 = vmatprep.subr.bf16.mxu0 0
    %216 = vmatpush1.bf16.msra.mxu0 %v173
    %217 = vmatprep.subr.bf16.mxu0 0
    %218 = vmatpush1.bf16.msra.mxu0 %v174
    %219 = vmatprep.subr.bf16.mxu0 0
    %220 = vmatpush1.bf16.msra.mxu0 %v175
    %221 = vmatprep.subr.bf16.mxu0 0
    %222 = vmatpush1.bf16.msra.mxu0 %v176
    %223 = vmatprep.subr.bf16.mxu0 0
    %224 = vmatpush1.bf16.msra.mxu0 %v177
    %225 = vmatprep.subr.bf16.mxu0 0
    %226 = vmatpush1.bf16.msra.mxu0 %v178
    %227 = vmatprep.mubr.bf16.mxu0 %v92
    %228 = vmatmul.mubr.bf16.gmra.mrb[0].mxu0 %v91
    %v229 = vpop.f32.mrb[0].mxu0
    %v230 = vadd.f32 %v80, %v229
    %v231 = vpop.f32.mrb[0].mxu0
    %v232 = vpop.f32.mrb[0].mxu0
    %v233 = vadd.f32 %v80, %v232
    %v234 = vpop.f32.mrb[0].mxu0
    %235 = vmatprep.mubr.bf16.mxu0 %v94
    %236 = vmatmul.mubr.bf16.gmra.mrb[0].mxu0 %v93
    %v237 = vpop.f32.mrb[0].mxu0
    %v238 = vadd.f32 %v80, %v237
    %v239 = vpop.f32.mrb[0].mxu0
    %v240 = vpop.f32.mrb[0].mxu0
    %v241 = vpop.f32.mrb[0].mxu0
    %242 = vdwg.mxu0
    %vm243 = vcmp.gt.f32.partialorder %v230, 0.0
    %vm244 = vcmp.gt.f32.partialorder %v233, 0.0
    %vm245 = vcmp.gt.f32.partialorder %v238, 0.0
    %v246 = vmul.f32 %v230, 0.01
    %v247 = vmul.f32 %v233, 0.01
    %v248 = vmul.f32 %v238, 0.01
    %v249 = vsel %vm243, %v230, %v246
    %v250 = vsel %vm244, %v233, %v247
    %v251 = vsel %vm245, %v238, %v248
    %v253 = vrot.slane %v249, 2
    %v255 = vrot.slane %v249, 4
    %v257 = vrot.slane %v249, 6
    %v260 = vrot.slane %v250, 2
    %v262 = vrot.slane %v250, 4
    %v264 = vrot.slane %v250, 6
    %v266 = vpack.c.bf16 %v249, %v249
    %v267 = vpack.c.bf16 %v253, %v253
    %v268 = vpack.c.bf16 %v255, %v255
    %v269 = vpack.c.bf16 %v257, %v257
    %v270 = vpack.c.bf16 %v250, %v250
    %v271 = vpack.c.bf16 %v260, %v260
    %v272 = vpack.c.bf16 %v262, %v262
    %v273 = vpack.c.bf16 %v264, %v264
    %v274 = vpack.c.bf16 %v251, %v251
    %v275 = vld [vmem:[%s3] sm:$0xf]
    %v276 = vld [vmem:[%s3 + $0x4] sm:$0xf]
    %v277 = vld [vmem:[%s3 + $0x8] sm:$0xf]
    %v278 = vld [vmem:[%s3 + $0xc] sm:$0xf]
    %v279 = vld [vmem:[%s3 + $0x10] sm:$0xf]
    %v280 = vld [vmem:[%s3 + $0x14] sm:$0xf]
    %v281 = vld [vmem:[%s3 + $0x18] sm:$0xf]
    %v282 = vld [vmem:[%s3 + $0x1c] sm:$0xf]
    %v283 = vld [vmem:[%s3 + $0x20] sm:$0xf]
    %v284 = vld [vmem:[%s3 + $0x24] sm:$0xf]
    %v285 = vld [vmem:[%s3 + $0x28] sm:$0xf]
    %v286 = vld [vmem:[%s3 + $0x2c] sm:$0xf]
    %v287 = vld [vmem:[%s3 + $0x30] sm:$0xf]
    %v288 = vld [vmem:[%s3 + $0x34] sm:$0xf]
    %v289 = vld [vmem:[%s3 + $0x38] sm:$0xf]
    %v290 = vld [vmem:[%s3 + $0x3c] sm:$0xf]
    %v291 = vld [vmem:[%s3 + $0x40] sm:$0xf]
    %v292 = vld [vmem:[%s3 + $0x44] sm:$0xf]
    %v293 = vld [vmem:[%s3 + $0x48] sm:$0xf]
    %v294 = vld [vmem:[%s3 + $0x4c] sm:$0xf]
    %v295 = vld [vmem:[%s3 + $0x50] sm:$0xf]
    %v296 = vld [vmem:[%s3 + $0x54] sm:$0xf]
    %v297 = vld [vmem:[%s3 + $0x58] sm:$0xf]
    %v298 = vld [vmem:[%s3 + $0x5c] sm:$0xf]
    %v299 = vld [vmem:[%s3 + $0x60] sm:$0xf]
    %v300 = vld [vmem:[%s3 + $0x64] sm:$0xf]
    %v301 = vld [vmem:[%s3 + $0x68] sm:$0xf]
    %v302 = vld [vmem:[%s3 + $0x6c] sm:$0xf]
    %v303 = vld [vmem:[%s3 + $0x70] sm:$0xf]
    %v304 = vld [vmem:[%s3 + $0x74] sm:$0xf]
    %v305 = vld [vmem:[%s3 + $0x78] sm:$0xf]
    %v306 = vld [vmem:[%s3 + $0x7c] sm:$0xf]
    %v307 = vld [vmem:[%s3 + $0x80] sm:$0xf]
    %v308 = vld [vmem:[%s3 + $0x84] sm:$0xf]
    %v309 = vld [vmem:[%s3 + $0x88] sm:$0xf]
    %v310 = vld [vmem:[%s3 + $0x8c] sm:$0xf]
    %v311 = vld [vmem:[%s3 + $0x90] sm:$0xf]
    %v312 = vld [vmem:[%s3 + $0x94] sm:$0xf]
    %v313 = vld [vmem:[%s3 + $0x98] sm:$0xf]
    %v314 = vld [vmem:[%s3 + $0x9c] sm:$0xf]
    %v315 = vld [vmem:[%s3 + $0xa0] sm:$0xf]
    %v316 = vld [vmem:[%s3 + $0xa4] sm:$0xf]
    %v317 = vld [vmem:[%s3 + $0xa8] sm:$0xf]
    %v318 = vld [vmem:[%s3 + $0xac] sm:$0xf]
    %v319 = vld [vmem:[%s3 + $0xb0] sm:$0xf]
    %v320 = vld [vmem:[%s3 + $0xb4] sm:$0xf]
    %v321 = vld [vmem:[%s3 + $0xb8] sm:$0xf]
    %v322 = vld [vmem:[%s3 + $0xbc] sm:$0xf]
    %v323 = vld [vmem:[%s3 + $0xc0] sm:$0xf]
    %v324 = vld [vmem:[%s3 + $0xc4] sm:$0xf]
    %v325 = vld [vmem:[%s3 + $0xc8] sm:$0xf]
    %v326 = vld [vmem:[%s3 + $0xcc] sm:$0xf]
    %v327 = vld [vmem:[%s3 + $0xd0] sm:$0xf]
    %v328 = vld [vmem:[%s3 + $0xd4] sm:$0xf]
    %v329 = vld [vmem:[%s3 + $0xd8] sm:$0xf]
    %v330 = vld [vmem:[%s3 + $0xdc] sm:$0xf]
    %v331 = vld [vmem:[%s3 + $0xe0] sm:$0xf]
    %v332 = vld [vmem:[%s3 + $0xe4] sm:$0xf]
    %v333 = vld [vmem:[%s3 + $0xe8] sm:$0xf]
    %v334 = vld [vmem:[%s3 + $0xec] sm:$0xf]
    %v335 = vld [vmem:[%s3 + $0xf0] sm:$0xf]
    %v336 = vld [vmem:[%s3 + $0xf4] sm:$0xf]
    %v337 = vld [vmem:[%s3 + $0xf8] sm:$0xf]
    %v338 = vld [vmem:[%s3 + $0xfc] sm:$0xf]
    %v339 = vld [vmem:[%s3 + $0x100] sm:$0xf]
    %v340 = vld [vmem:[%s3 + $0x104] sm:$0xf]
    %v341 = vld [vmem:[%s3 + $0x108] sm:$0xf]
    %v342 = vld [vmem:[%s3 + $0x10c] sm:$0xf]
    %v343 = vld [vmem:[%s3 + $0x110] sm:$0xf]
    %v344 = vld [vmem:[%s3 + $0x114] sm:$0xf]
    %v345 = vld [vmem:[%s3 + $0x118] sm:$0xf]
    %v346 = vld [vmem:[%s3 + $0x11c] sm:$0xf]
    %v347 = vld [vmem:[%s3 + $0x120] sm:$0xf]
    %v348 = vld [vmem:[%s3 + $0x124] sm:$0xf]
    %v349 = vld [vmem:[%s3 + $0x128] sm:$0xf]
    %v350 = vld [vmem:[%s3 + $0x12c] sm:$0xf]
    %v351 = vld [vmem:[%s3 + $0x130] sm:$0xf]
    %v352 = vld [vmem:[%s3 + $0x134] sm:$0xf]
    %v353 = vld [vmem:[%s3 + $0x138] sm:$0xf]
    %v354 = vld [vmem:[%s3 + $0x13c] sm:$0xf]
    %v355 = vld [vmem:[%s3 + $0x140] sm:$0xf]
    %v356 = vld [vmem:[%s3 + $0x144] sm:$0xf]
    %v357 = vld [vmem:[%s3 + $0x148] sm:$0xf]
    %v358 = vld [vmem:[%s3 + $0x14c] sm:$0xf]
    %v359 = vld [vmem:[%s3 + $0x150] sm:$0xf]
    %v360 = vld [vmem:[%s3 + $0x154] sm:$0xf]
    %v361 = vld [vmem:[%s3 + $0x158] sm:$0xf]
    %v362 = vld [vmem:[%s3 + $0x15c] sm:$0xf]
    %v363 = vld [vmem:[%s3 + $0x160] sm:$0xf]
    %v364 = vld [vmem:[%s3 + $0x164] sm:$0xf]
    %v365 = vld [vmem:[%s3 + $0x168] sm:$0xf]
    %v366 = vld [vmem:[%s3 + $0x16c] sm:$0xf]
    %v367 = vld [vmem:[%s3 + $0x170] sm:$0xf]
    %v368 = vld [vmem:[%s3 + $0x174] sm:$0xf]
    %v369 = vld [vmem:[%s3 + $0x178] sm:$0xf]
    %v370 = vld [vmem:[%s3 + $0x17c] sm:$0xf]
    %v371 = vld [vmem:[%s3 + $0x180] sm:$0xf]
    %v372 = vld [vmem:[%s3 + $0x184] sm:$0xf]
    %v373 = vld [vmem:[%s3 + $0x188] sm:$0xf]
    %v374 = vld [vmem:[%s3 + $0x18c] sm:$0xf]
    %v375 = vld [vmem:[%s3 + $0x190] sm:$0xf]
    %v376 = vld [vmem:[%s3 + $0x194] sm:$0xf]
    %v377 = vld [vmem:[%s3 + $0x198] sm:$0xf]
    %v378 = vld [vmem:[%s3 + $0x19c] sm:$0xf]
    %v379 = vld [vmem:[%s3 + $0x1a0] sm:$0xf]
    %v380 = vld [vmem:[%s3 + $0x1a4] sm:$0xf]
    %v381 = vld [vmem:[%s3 + $0x1a8] sm:$0xf]
    %v382 = vld [vmem:[%s3 + $0x1ac] sm:$0xf]
    %v383 = vld [vmem:[%s3 + $0x1b0] sm:$0xf]
    %v384 = vld [vmem:[%s3 + $0x1b4] sm:$0xf]
    %v385 = vld [vmem:[%s3 + $0x1b8] sm:$0xf]
    %v386 = vld [vmem:[%s3 + $0x1bc] sm:$0xf]
    %v387 = vld [vmem:[%s3 + $0x1c0] sm:$0xf]
    %v388 = vld [vmem:[%s3 + $0x1c4] sm:$0xf]
    %v389 = vld [vmem:[%s3 + $0x1c8] sm:$0xf]
    %v390 = vld [vmem:[%s3 + $0x1cc] sm:$0xf]
    %v391 = vld [vmem:[%s3 + $0x1d0] sm:$0xf]
    %v392 = vld [vmem:[%s3 + $0x1d4] sm:$0xf]
    %v393 = vld [vmem:[%s3 + $0x1d8] sm:$0xf]
    %v394 = vld [vmem:[%s3 + $0x1dc] sm:$0xf]
    %v395 = vld [vmem:[%s3 + $0x1e0] sm:$0xf]
    %v396 = vld [vmem:[%s3 + $0x1e4] sm:$0xf]
    %v397 = vld [vmem:[%s3 + $0x1e8] sm:$0xf]
    %v398 = vld [vmem:[%s3 + $0x1ec] sm:$0xf]
    %v399 = vld [vmem:[%s3 + $0x1f0] sm:$0xf]
    %v400 = vld [vmem:[%s3 + $0x1f4] sm:$0xf]
    %v401 = vld [vmem:[%s3 + $0x1f8] sm:$0xf]
    %v402 = vld [vmem:[%s3 + $0x1fc] sm:$0xf]
    %v403 = vld [vmem:[%s3 + $0x200] sm:$0xf]
    %v404 = vld [vmem:[%s3 + $0x204] sm:$0xf]
    %v405 = vld [vmem:[%s3 + $0x208] sm:$0xf]
    %v406 = vld [vmem:[%s3 + $0x20c] sm:$0xf]
    %v407 = vld [vmem:[%s3 + $0x210] sm:$0xf]
    %v408 = vld [vmem:[%s3 + $0x214] sm:$0xf]
    %v409 = vld [vmem:[%s3 + $0x218] sm:$0xf]
    %v410 = vld [vmem:[%s3 + $0x21c] sm:$0xf]
    %v411 = vld [vmem:[%s3 + $0x220] sm:$0xf]
    %v412 = vld [vmem:[%s3 + $0x224] sm:$0xf]
    %v413 = vld [vmem:[%s3 + $0x228] sm:$0xf]
    %v414 = vld [vmem:[%s3 + $0x22c] sm:$0xf]
    %v415 = vld [vmem:[%s3 + $0x230] sm:$0xf]
    %v416 = vld [vmem:[%s3 + $0x234] sm:$0xf]
    %v417 = vld [vmem:[%s3 + $0x238] sm:$0xf]
    %v418 = vld [vmem:[%s3 + $0x23c] sm:$0xf]
    %v419 = vld [vmem:[%s4] sm:$0x1]
    %v421 = vlaneseq
    %v422 = vshrl.u32 %v421, 7
    %v423 = vsub.s32 0, %v422
    %v424 = vrot.slane %v419, %v423
    %v570 = vunpack.c.l.b16 %v275
    %v571 = vunpack.c.l.b16 %v276
    %v572 = vunpack.c.l.b16 %v277
    %v573 = vunpack.c.l.b16 %v278
    %v574 = vunpack.c.l.b16 %v279
    %v575 = vunpack.c.l.b16 %v280
    %v576 = vunpack.c.l.b16 %v281
    %v577 = vunpack.c.l.b16 %v282
    %v578 = vunpack.c.l.b16 %v283
    %v579 = vunpack.c.l.b16 %v284
    %v580 = vunpack.c.l.b16 %v285
    %v581 = vunpack.c.l.b16 %v286
    %v582 = vunpack.c.l.b16 %v287
    %v583 = vunpack.c.l.b16 %v288
    %v584 = vunpack.c.l.b16 %v289
    %v585 = vunpack.c.l.b16 %v290
    %v586 = vunpack.c.l.b16 %v291
    %v587 = vunpack.c.l.b16 %v292
    %v588 = vunpack.c.l.b16 %v293
    %v589 = vunpack.c.l.b16 %v294
    %v590 = vunpack.c.l.b16 %v295
    %v591 = vunpack.c.l.b16 %v296
    %v592 = vunpack.c.l.b16 %v297
    %v593 = vunpack.c.l.b16 %v298
    %v594 = vunpack.c.l.b16 %v299
    %v595 = vunpack.c.l.b16 %v300
    %v596 = vunpack.c.l.b16 %v301
    %v597 = vunpack.c.l.b16 %v302
    %v598 = vunpack.c.l.b16 %v303
    %v599 = vunpack.c.l.b16 %v304
    %v600 = vunpack.c.l.b16 %v305
    %v601 = vunpack.c.l.b16 %v306
    %v602 = vunpack.c.l.b16 %v307
    %v603 = vunpack.c.l.b16 %v308
    %v604 = vunpack.c.l.b16 %v309
    %v605 = vunpack.c.l.b16 %v310
    %v606 = vunpack.c.l.b16 %v311
    %v607 = vunpack.c.l.b16 %v312
    %v608 = vunpack.c.l.b16 %v313
    %v609 = vunpack.c.l.b16 %v314
    %v610 = vunpack.c.l.b16 %v315
    %v611 = vunpack.c.l.b16 %v316
    %v612 = vunpack.c.l.b16 %v317
    %v613 = vunpack.c.l.b16 %v318
    %v614 = vunpack.c.l.b16 %v319
    %v615 = vunpack.c.l.b16 %v320
    %v616 = vunpack.c.l.b16 %v321
    %v617 = vunpack.c.l.b16 %v322
    %v618 = vunpack.c.l.b16 %v323
    %v619 = vunpack.c.l.b16 %v324
    %v620 = vunpack.c.l.b16 %v325
    %v621 = vunpack.c.l.b16 %v326
    %v622 = vunpack.c.l.b16 %v327
    %v623 = vunpack.c.l.b16 %v328
    %v624 = vunpack.c.l.b16 %v329
    %v625 = vunpack.c.l.b16 %v330
    %v626 = vunpack.c.l.b16 %v331
    %v627 = vunpack.c.l.b16 %v332
    %v628 = vunpack.c.l.b16 %v333
    %v629 = vunpack.c.l.b16 %v334
    %v630 = vunpack.c.l.b16 %v335
    %v631 = vunpack.c.l.b16 %v336
    %v632 = vunpack.c.l.b16 %v337
    %v633 = vunpack.c.l.b16 %v338
    %v634 = vunpack.c.l.b16 %v339
    %v635 = vunpack.c.l.b16 %v340
    %v636 = vunpack.c.l.b16 %v341
    %v637 = vunpack.c.l.b16 %v342
    %v638 = vunpack.c.l.b16 %v343
    %v639 = vunpack.c.l.b16 %v344
    %v640 = vunpack.c.l.b16 %v345
    %v641 = vunpack.c.l.b16 %v346
    %v642 = vunpack.c.l.b16 %v347
    %v643 = vunpack.c.l.b16 %v348
    %v644 = vunpack.c.l.b16 %v349
    %v645 = vunpack.c.l.b16 %v350
    %v646 = vunpack.c.l.b16 %v351
    %v647 = vunpack.c.l.b16 %v352
    %v648 = vunpack.c.l.b16 %v353
    %v649 = vunpack.c.l.b16 %v354
    %v650 = vunpack.c.l.b16 %v355
    %v651 = vunpack.c.l.b16 %v356
    %v652 = vunpack.c.l.b16 %v357
    %v653 = vunpack.c.l.b16 %v358
    %v654 = vunpack.c.l.b16 %v359
    %v655 = vunpack.c.l.b16 %v360
    %v656 = vunpack.c.l.b16 %v361
    %v657 = vunpack.c.l.b16 %v362
    %v658 = vunpack.c.l.b16 %v363
    %v659 = vunpack.c.l.b16 %v364
    %v660 = vunpack.c.l.b16 %v365
    %v661 = vunpack.c.l.b16 %v366
    %v662 = vunpack.c.l.b16 %v367
    %v663 = vunpack.c.l.b16 %v368
    %v664 = vunpack.c.l.b16 %v369
    %v665 = vunpack.c.l.b16 %v370
    %v666 = vunpack.c.l.b16 %v371
    %v667 = vunpack.c.l.b16 %v372
    %v668 = vunpack.c.l.b16 %v373
    %v669 = vunpack.c.l.b16 %v374
    %v670 = vunpack.c.l.b16 %v375
    %v671 = vunpack.c.l.b16 %v376
    %v672 = vunpack.c.l.b16 %v377
    %v673 = vunpack.c.l.b16 %v378
    %v674 = vunpack.c.l.b16 %v379
    %v675 = vunpack.c.l.b16 %v380
    %v676 = vunpack.c.l.b16 %v381
    %v677 = vunpack.c.l.b16 %v382
    %v678 = vunpack.c.l.b16 %v383
    %v679 = vunpack.c.l.b16 %v384
    %v680 = vunpack.c.l.b16 %v385
    %v681 = vunpack.c.l.b16 %v386
    %v682 = vunpack.c.l.b16 %v387
    %v683 = vunpack.c.l.b16 %v388
    %v684 = vunpack.c.l.b16 %v389
    %v685 = vunpack.c.l.b16 %v390
    %v686 = vunpack.c.l.b16 %v391
    %v687 = vunpack.c.l.b16 %v392
    %v688 = vunpack.c.l.b16 %v393
    %v689 = vunpack.c.l.b16 %v394
    %v690 = vunpack.c.l.b16 %v395
    %v691 = vunpack.c.l.b16 %v396
    %v692 = vunpack.c.l.b16 %v397
    %v693 = vunpack.c.l.b16 %v398
    %v694 = vunpack.c.l.b16 %v399
    %v695 = vunpack.c.l.b16 %v400
    %v696 = vunpack.c.l.b16 %v401
    %v697 = vunpack.c.l.b16 %v402
    %v698 = vunpack.c.l.b16 %v403
    %v699 = vunpack.c.l.b16 %v404
    %v700 = vunpack.c.l.b16 %v405
    %v701 = vunpack.c.l.b16 %v406
    %v702 = vunpack.c.l.b16 %v407
    %v703 = vunpack.c.l.b16 %v408
    %v704 = vunpack.c.l.b16 %v409
    %v705 = vunpack.c.l.b16 %v410
    %v706 = vunpack.c.l.b16 %v411
    %v707 = vunpack.c.l.b16 %v412
    %v708 = vunpack.c.l.b16 %v413
    %v709 = vunpack.c.l.b16 %v414
    %v710 = vunpack.c.l.b16 %v415
    %v711 = vunpack.c.l.b16 %v416
    %v712 = vunpack.c.l.b16 %v417
    %v713 = vunpack.c.l.b16 %v418
    %v714 = vpack.c.b16 %v571, %v570
    %v715 = vpack.c.b16 %v573, %v572
    %v716 = vpack.c.b16 %v575, %v574
    %v717 = vpack.c.b16 %v577, %v576
    %v718 = vpack.c.b16 %v579, %v578
    %v719 = vpack.c.b16 %v581, %v580
    %v720 = vpack.c.b16 %v583, %v582
    %v721 = vpack.c.b16 %v585, %v584
    %v722 = vpack.c.b16 %v587, %v586
    %v723 = vpack.c.b16 %v589, %v588
    %v724 = vpack.c.b16 %v591, %v590
    %v725 = vpack.c.b16 %v593, %v592
    %v726 = vpack.c.b16 %v595, %v594
    %v727 = vpack.c.b16 %v597, %v596
    %v728 = vpack.c.b16 %v599, %v598
    %v729 = vpack.c.b16 %v601, %v600
    %v730 = vpack.c.b16 %v603, %v602
    %v731 = vpack.c.b16 %v605, %v604
    %v732 = vpack.c.b16 %v607, %v606
    %v733 = vpack.c.b16 %v609, %v608
    %v734 = vpack.c.b16 %v611, %v610
    %v735 = vpack.c.b16 %v613, %v612
    %v736 = vpack.c.b16 %v615, %v614
    %v737 = vpack.c.b16 %v617, %v616
    %v738 = vpack.c.b16 %v619, %v618
    %v739 = vpack.c.b16 %v621, %v620
    %v740 = vpack.c.b16 %v623, %v622
    %v741 = vpack.c.b16 %v625, %v624
    %v742 = vpack.c.b16 %v627, %v626
    %v743 = vpack.c.b16 %v629, %v628
    %v744 = vpack.c.b16 %v631, %v630
    %v745 = vpack.c.b16 %v633, %v632
    %v746 = vpack.c.b16 %v635, %v634
    %v747 = vpack.c.b16 %v637, %v636
    %v748 = vpack.c.b16 %v639, %v638
    %v749 = vpack.c.b16 %v641, %v640
    %v750 = vpack.c.b16 %v643, %v642
    %v751 = vpack.c.b16 %v645, %v644
    %v752 = vpack.c.b16 %v647, %v646
    %v753 = vpack.c.b16 %v649, %v648
    %v754 = vpack.c.b16 %v651, %v650
    %v755 = vpack.c.b16 %v653, %v652
    %v756 = vpack.c.b16 %v655, %v654
    %v757 = vpack.c.b16 %v657, %v656
    %v758 = vpack.c.b16 %v659, %v658
    %v759 = vpack.c.b16 %v661, %v660
    %v760 = vpack.c.b16 %v663, %v662
    %v761 = vpack.c.b16 %v665, %v664
    %v762 = vpack.c.b16 %v667, %v666
    %v763 = vpack.c.b16 %v669, %v668
    %v764 = vpack.c.b16 %v671, %v670
    %v765 = vpack.c.b16 %v673, %v672
    %v766 = vpack.c.b16 %v675, %v674
    %v767 = vpack.c.b16 %v677, %v676
    %v768 = vpack.c.b16 %v679, %v678
    %v769 = vpack.c.b16 %v681, %v680
    %v770 = vpack.c.b16 %v683, %v682
    %v771 = vpack.c.b16 %v685, %v684
    %v772 = vpack.c.b16 %v687, %v686
    %v773 = vpack.c.b16 %v689, %v688
    %v774 = vpack.c.b16 %v691, %v690
    %v775 = vpack.c.b16 %v693, %v692
    %v776 = vpack.c.b16 %v695, %v694
    %v777 = vpack.c.b16 %v697, %v696
    %v778 = vpack.c.b16 %v699, %v698
    %v779 = vpack.c.b16 %v701, %v700
    %v780 = vpack.c.b16 %v703, %v702
    %v781 = vpack.c.b16 %v705, %v704
    %v782 = vpack.c.b16 %v707, %v706
    %v783 = vpack.c.b16 %v709, %v708
    %v784 = vpack.c.b16 %v711, %v710
    %v785 = vpack.c.b16 %v713, %v712
    %858 = vmatprep.subr.bf16.mxu0 0
    %859 = vmatpush1.bf16.msra.mxu0 %v714
    %860 = vmatprep.subr.bf16.mxu0 0
    %861 = vmatpush1.bf16.msra.mxu0 %v715
    %862 = vmatprep.subr.bf16.mxu0 0
    %863 = vmatpush1.bf16.msra.mxu0 %v716
    %864 = vmatprep.subr.bf16.mxu0 0
    %865 = vmatpush1.bf16.msra.mxu0 %v717
    %866 = vmatprep.subr.bf16.mxu0 0
    %867 = vmatpush1.bf16.msra.mxu0 %v718
    %868 = vmatprep.subr.bf16.mxu0 0
    %869 = vmatpush1.bf16.msra.mxu0 %v719
    %870 = vmatprep.subr.bf16.mxu0 0
    %871 = vmatpush1.bf16.msra.mxu0 %v720
    %872 = vmatprep.subr.bf16.mxu0 0
    %873 = vmatpush1.bf16.msra.mxu0 %v721
    %874 = vmatprep.subr.bf16.mxu0 0
    %875 = vmatpush1.bf16.msra.mxu0 %v722
    %876 = vmatprep.subr.bf16.mxu0 0
    %877 = vmatpush1.bf16.msra.mxu0 %v723
    %878 = vmatprep.subr.bf16.mxu0 0
    %879 = vmatpush1.bf16.msra.mxu0 %v724
    %880 = vmatprep.subr.bf16.mxu0 0
    %881 = vmatpush1.bf16.msra.mxu0 %v725
    %882 = vmatprep.subr.bf16.mxu0 0
    %883 = vmatpush1.bf16.msra.mxu0 %v726
    %884 = vmatprep.subr.bf16.mxu0 0
    %885 = vmatpush1.bf16.msra.mxu0 %v727
    %886 = vmatprep.subr.bf16.mxu0 0
    %887 = vmatpush1.bf16.msra.mxu0 %v728
    %888 = vmatprep.subr.bf16.mxu0 0
    %889 = vmatpush1.bf16.msra.mxu0 %v729
    %890 = vmatprep.mubr.bf16.mxu0 %v267
    %891 = vmatmul.mubr.bf16.gmra.mrb[0].mxu0 %v266
    %v892 = vpop.f32.mrb[0].mxu0
    %v893 = vadd.f32 %v424, %v892
    %v894 = vpop.f32.mrb[0].mxu0
    %v895 = vpop.f32.mrb[0].mxu0
    %v896 = vpop.f32.mrb[0].mxu0
    %897 = vdwg.mxu0
    %898 = vmatprep.subr.bf16.mxu0 0
    %899 = vmatpush1.bf16.msra.mxu0 %v730
    %900 = vmatprep.subr.bf16.mxu0 0
    %901 = vmatpush1.bf16.msra.mxu0 %v731
    %902 = vmatprep.subr.bf16.mxu0 0
    %903 = vmatpush1.bf16.msra.mxu0 %v732
    %904 = vmatprep.subr.bf16.mxu0 0
    %905 = vmatpush1.bf16.msra.mxu0 %v733
    %906 = vmatprep.subr.bf16.mxu0 0
    %907 = vmatpush1.bf16.msra.mxu0 %v734
    %908 = vmatprep.subr.bf16.mxu0 0
    %909 = vmatpush1.bf16.msra.mxu0 %v735
    %910 = vmatprep.subr.bf16.mxu0 0
    %911 = vmatpush1.bf16.msra.mxu0 %v736
    %912 = vmatprep.subr.bf16.mxu0 0
    %913 = vmatpush1.bf16.msra.mxu0 %v737
    %914 = vmatprep.subr.bf16.mxu0 0
    %915 = vmatpush1.bf16.msra.mxu0 %v738
    %916 = vmatprep.subr.bf16.mxu0 0
    %917 = vmatpush1.bf16.msra.mxu0 %v739
    %918 = vmatprep.subr.bf16.mxu0 0
    %919 = vmatpush1.bf16.msra.mxu0 %v740
    %920 = vmatprep.subr.bf16.mxu0 0
    %921 = vmatpush1.bf16.msra.mxu0 %v741
    %922 = vmatprep.subr.bf16.mxu0 0
    %923 = vmatpush1.bf16.msra.mxu0 %v742
    %924 = vmatprep.subr.bf16.mxu0 0
    %925 = vmatpush1.bf16.msra.mxu0 %v743
    %926 = vmatprep.subr.bf16.mxu0 0
    %927 = vmatpush1.bf16.msra.mxu0 %v744
    %928 = vmatprep.subr.bf16.mxu0 0
    %929 = vmatpush1.bf16.msra.mxu0 %v745
    %930 = vmatprep.mubr.bf16.mxu0 %v269
    %931 = vmatmul.mubr.bf16.gmra.mrb[0].mxu0 %v268
    %v932 = vpop.f32.mrb[0].mxu0
    %v933 = vadd.f32 %v893, %v932
    %v934 = vpop.f32.mrb[0].mxu0
    %v935 = vpop.f32.mrb[0].mxu0
    %v936 = vpop.f32.mrb[0].mxu0
    %937 = vdwg.mxu0
    %938 = vmatprep.subr.bf16.mxu0 0
    %939 = vmatpush1.bf16.msra.mxu0 %v746
    %940 = vmatprep.subr.bf16.mxu0 0
    %941 = vmatpush1.bf16.msra.mxu0 %v747
    %942 = vmatprep.subr.bf16.mxu0 0
    %943 = vmatpush1.bf16.msra.mxu0 %v748
    %944 = vmatprep.subr.bf16.mxu0 0
    %945 = vmatpush1.bf16.msra.mxu0 %v749
    %946 = vmatprep.subr.bf16.mxu0 0
    %947 = vmatpush1.bf16.msra.mxu0 %v750
    %948 = vmatprep.subr.bf16.mxu0 0
    %949 = vmatpush1.bf16.msra.mxu0 %v751
    %950 = vmatprep.subr.bf16.mxu0 0
    %951 = vmatpush1.bf16.msra.mxu0 %v752
    %952 = vmatprep.subr.bf16.mxu0 0
    %953 = vmatpush1.bf16.msra.mxu0 %v753
    %954 = vmatprep.subr.bf16.mxu0 0
    %955 = vmatpush1.bf16.msra.mxu0 %v754
    %956 = vmatprep.subr.bf16.mxu0 0
    %957 = vmatpush1.bf16.msra.mxu0 %v755
    %958 = vmatprep.subr.bf16.mxu0 0
    %959 = vmatpush1.bf16.msra.mxu0 %v756
    %960 = vmatprep.subr.bf16.mxu0 0
    %961 = vmatpush1.bf16.msra.mxu0 %v757
    %962 = vmatprep.subr.bf16.mxu0 0
    %963 = vmatpush1.bf16.msra.mxu0 %v758
    %964 = vmatprep.subr.bf16.mxu0 0
    %965 = vmatpush1.bf16.msra.mxu0 %v759
    %966 = vmatprep.subr.bf16.mxu0 0
    %967 = vmatpush1.bf16.msra.mxu0 %v760
    %968 = vmatprep.subr.bf16.mxu0 0
    %969 = vmatpush1.bf16.msra.mxu0 %v761
    %970 = vmatprep.mubr.bf16.mxu0 %v271
    %971 = vmatmul.mubr.bf16.gmra.mrb[0].mxu0 %v270
    %v972 = vpop.f32.mrb[0].mxu0
    %v973 = vadd.f32 %v933, %v972
    %v974 = vpop.f32.mrb[0].mxu0
    %v975 = vpop.f32.mrb[0].mxu0
    %v976 = vpop.f32.mrb[0].mxu0
    %977 = vdwg.mxu0
    %978 = vmatprep.subr.bf16.mxu0 0
    %979 = vmatpush1.bf16.msra.mxu0 %v762
    %980 = vmatprep.subr.bf16.mxu0 0
    %981 = vmatpush1.bf16.msra.mxu0 %v763
    %982 = vmatprep.subr.bf16.mxu0 0
    %983 = vmatpush1.bf16.msra.mxu0 %v764
    %984 = vmatprep.subr.bf16.mxu0 0
    %985 = vmatpush1.bf16.msra.mxu0 %v765
    %986 = vmatprep.subr.bf16.mxu0 0
    %987 = vmatpush1.bf16.msra.mxu0 %v766
    %988 = vmatprep.subr.bf16.mxu0 0
    %989 = vmatpush1.bf16.msra.mxu0 %v767
    %990 = vmatprep.subr.bf16.mxu0 0
    %991 = vmatpush1.bf16.msra.mxu0 %v768
    %992 = vmatprep.subr.bf16.mxu0 0
    %993 = vmatpush1.bf16.msra.mxu0 %v769
    %994 = vmatprep.subr.bf16.mxu0 0
    %995 = vmatpush1.bf16.msra.mxu0 %v770
    %996 = vmatprep.subr.bf16.mxu0 0
    %997 = vmatpush1.bf16.msra.mxu0 %v771
    %998 = vmatprep.subr.bf16.mxu0 0
    %999 = vmatpush1.bf16.msra.mxu0 %v772
    %1000 = vmatprep.subr.bf16.mxu0 0
    %1001 = vmatpush1.bf16.msra.mxu0 %v773
    %1002 = vmatprep.subr.bf16.mxu0 0
    %1003 = vmatpush1.bf16.msra.mxu0 %v774
    %1004 = vmatprep.subr.bf16.mxu0 0
    %1005 = vmatpush1.bf16.msra.mxu0 %v775
    %1006 = vmatprep.subr.bf16.mxu0 0
    %1007 = vmatpush1.bf16.msra.mxu0 %v776
    %1008 = vmatprep.subr.bf16.mxu0 0
    %1009 = vmatpush1.bf16.msra.mxu0 %v777
    %1010 = vmatprep.mubr.bf16.mxu0 %v273
    %1011 = vmatmul.mubr.bf16.gmra.mrb[0].mxu0 %v272
    %v1012 = vpop.f32.mrb[0].mxu0
    %v1013 = vadd.f32 %v973, %v1012
    %v1014 = vpop.f32.mrb[0].mxu0
    %v1015 = vpop.f32.mrb[0].mxu0
    %v1016 = vpop.f32.mrb[0].mxu0
    %1017 = vdwg.mxu0
    %1018 = vmatprep.subr.bf16.mxu0 0
    %1019 = vmatpush1.bf16.msra.mxu0 %v778
    %1020 = vmatprep.subr.bf16.mxu0 0
    %1021 = vmatpush1.bf16.msra.mxu0 %v779
    %1022 = vmatprep.subr.bf16.mxu0 0
    %1023 = vmatpush1.bf16.msra.mxu0 %v780
    %1024 = vmatprep.subr.bf16.mxu0 0
    %1025 = vmatpush1.bf16.msra.mxu0 %v781
    %1026 = vmatprep.subr.bf16.mxu0 0
    %1027 = vmatpush1.bf16.msra.mxu0 %v782
    %1028 = vmatprep.subr.bf16.mxu0 0
    %1029 = vmatpush1.bf16.msra.mxu0 %v783
    %1030 = vmatprep.subr.bf16.mxu0 0
    %1031 = vmatpush1.bf16.msra.mxu0 %v784
    %1032 = vmatprep.subr.bf16.mxu0 0
    %1033 = vmatpush1.bf16.msra.mxu0 %v785
    %1034 = vmatprep.subr.bf16.mxu0 0
    %1035 = vmatpush1.bf16.msra.mxu0 0
    %1036 = vmatprep.subr.bf16.mxu0 0
    %1037 = vmatpush1.bf16.msra.mxu0 0
    %1038 = vmatprep.subr.bf16.mxu0 0
    %1039 = vmatpush1.bf16.msra.mxu0 0
    %1040 = vmatprep.subr.bf16.mxu0 0
    %1041 = vmatpush1.bf16.msra.mxu0 0
    %1042 = vmatprep.subr.bf16.mxu0 0
    %1043 = vmatpush1.bf16.msra.mxu0 0
    %1044 = vmatprep.subr.bf16.mxu0 0
    %1045 = vmatpush1.bf16.msra.mxu0 0
    %1046 = vmatprep.subr.bf16.mxu0 0
    %1047 = vmatpush1.bf16.msra.mxu0 0
    %1048 = vmatprep.subr.bf16.mxu0 0
    %1049 = vmatpush1.bf16.msra.mxu0 0
    %1050 = vmatprep.mubr.bf16.mxu0 0
    %1051 = vmatmul.mubr.bf16.gmra.mrb[0].mxu0 %v274
    %v1052 = vpop.f32.mrb[0].mxu0
    %v1053 = vadd.f32 %v1013, %v1052
    %v1054 = vpop.f32.mrb[0].mxu0
    %v1055 = vpop.f32.mrb[0].mxu0
    %v1056 = vpop.f32.mrb[0].mxu0
    %1057 = vdwg.mxu0
    %vm1058 = vcmp.gt.f32.partialorder %v1053, 0.0
    %v1059 = vmul.f32 %v1053, 0.01
    %v1060 = vsel %vm1058, %v1053, %v1059
    %v1061 = vpack.c.bf16 %v1060, %v1060
    %v1062 = vld [vmem:[%s5] sm:$0xf]
    %v1063 = vld [vmem:[%s5 + $0x4] sm:$0xf]
    %v1064 = vld [vmem:[%s5 + $0x8] sm:$0xf]
    %v1065 = vld [vmem:[%s5 + $0xc] sm:$0xf]
    %v1066 = vld [vmem:[%s5 + $0x10] sm:$0xf]
    %v1067 = vld [vmem:[%s5 + $0x14] sm:$0xf]
    %v1068 = vld [vmem:[%s5 + $0x18] sm:$0xf]
    %v1069 = vld [vmem:[%s5 + $0x1c] sm:$0xf]
    %v1070 = vld [vmem:[%s5 + $0x20] sm:$0xf]
    %v1071 = vld [vmem:[%s5 + $0x24] sm:$0xf]
    %v1072 = vld [vmem:[%s5 + $0x28] sm:$0xf]
    %v1073 = vld [vmem:[%s5 + $0x2c] sm:$0xf]
    %v1074 = vld [vmem:[%s5 + $0x30] sm:$0xf]
    %v1075 = vld [vmem:[%s5 + $0x34] sm:$0xf]
    %v1076 = vld [vmem:[%s5 + $0x38] sm:$0xf]
    %v1077 = vld [vmem:[%s5 + $0x3c] sm:$0xf]
    %v1078 = vld [vmem:[%s6] sm:$0x1]
    %v1080 = vlaneseq
    %v1081 = vshrl.u32 %v1080, 7
    %v1082 = vsub.s32 0, %v1081
    %v1083 = vrot.slane %v1078, %v1082
    %v1101 = vunpack.c.l.b16 %v1062
    %v1102 = vunpack.c.l.b16 %v1063
    %v1103 = vunpack.c.l.b16 %v1064
    %v1104 = vunpack.c.l.b16 %v1065
    %v1105 = vunpack.c.l.b16 %v1066
    %v1106 = vunpack.c.l.b16 %v1067
    %v1107 = vunpack.c.l.b16 %v1068
    %v1108 = vunpack.c.l.b16 %v1069
    %v1109 = vunpack.c.l.b16 %v1070
    %v1110 = vunpack.c.l.b16 %v1071
    %v1111 = vunpack.c.l.b16 %v1072
    %v1112 = vunpack.c.l.b16 %v1073
    %v1113 = vunpack.c.l.b16 %v1074
    %v1114 = vunpack.c.l.b16 %v1075
    %v1115 = vunpack.c.l.b16 %v1076
    %v1116 = vunpack.c.l.b16 %v1077
    %v1117 = vpack.c.b16 %v1102, %v1101
    %v1118 = vpack.c.b16 %v1104, %v1103
    %v1119 = vpack.c.b16 %v1106, %v1105
    %v1120 = vpack.c.b16 %v1108, %v1107
    %v1121 = vpack.c.b16 %v1110, %v1109
    %v1122 = vpack.c.b16 %v1112, %v1111
    %v1123 = vpack.c.b16 %v1114, %v1113
    %v1124 = vpack.c.b16 %v1116, %v1115
    %1133 = vmatprep.subr.bf16.mxu0 0
    %1134 = vmatpush1.bf16.msra.mxu0 %v1117
    %1135 = vmatprep.subr.bf16.mxu0 0
    %1136 = vmatpush1.bf16.msra.mxu0 %v1118
    %1137 = vmatprep.subr.bf16.mxu0 0
    %1138 = vmatpush1.bf16.msra.mxu0 %v1119
    %1139 = vmatprep.subr.bf16.mxu0 0
    %1140 = vmatpush1.bf16.msra.mxu0 %v1120
    %1141 = vmatprep.subr.bf16.mxu0 0
    %1142 = vmatpush1.bf16.msra.mxu0 %v1121
    %1143 = vmatprep.subr.bf16.mxu0 0
    %1144 = vmatpush1.bf16.msra.mxu0 %v1122
    %1145 = vmatprep.subr.bf16.mxu0 0
    %1146 = vmatpush1.bf16.msra.mxu0 %v1123
    %1147 = vmatprep.subr.bf16.mxu0 0
    %1148 = vmatpush1.bf16.msra.mxu0 %v1124
    %1149 = vmatprep.subr.bf16.mxu0 0
    %1150 = vmatpush1.bf16.msra.mxu0 0
    %1151 = vmatprep.subr.bf16.mxu0 0
    %1152 = vmatpush1.bf16.msra.mxu0 0
    %1153 = vmatprep.subr.bf16.mxu0 0
    %1154 = vmatpush1.bf16.msra.mxu0 0
    %1155 = vmatprep.subr.bf16.mxu0 0
    %1156 = vmatpush1.bf16.msra.mxu0 0
    %1157 = vmatprep.subr.bf16.mxu0 0
    %1158 = vmatpush1.bf16.msra.mxu0 0
    %1159 = vmatprep.subr.bf16.mxu0 0
    %1160 = vmatpush1.bf16.msra.mxu0 0
    %1161 = vmatprep.subr.bf16.mxu0 0
    %1162 = vmatpush1.bf16.msra.mxu0 0
    %1163 = vmatprep.subr.bf16.mxu0 0
    %1164 = vmatpush1.bf16.msra.mxu0 0
    %1165 = vmatprep.mubr.bf16.mxu0 0
    %1166 = vmatmul.mubr.bf16.gmra.mrb[0].mxu0 %v1061
    %v1167 = vpop.f32.mrb[0].mxu0
    %v1168 = vadd.f32 %v1083, %v1167
    %v1169 = vpop.f32.mrb[0].mxu0
    %v1170 = vpop.f32.mrb[0].mxu0
    %v1171 = vpop.f32.mrb[0].mxu0
    %1172 = vdwg.mxu0
    %vm1173 = vcmp.gt.f32.partialorder %v1168, 0.0
    %v1174 = vmul.f32 %v1168, 0.01
    %v1175 = vsel %vm1173, %v1168, %v1174
    %v1176 = vpack.c.bf16 %v1175, %v1175
    %v1177 = vld [vmem:[%s7] sm:$0xff]
    %v1178 = vld [vmem:[%s7 + $0x8] sm:$0xff]
    %v1179 = vld [vmem:[%s7 + $0x10] sm:$0xff]
    %v1180 = vld [vmem:[%s7 + $0x18] sm:$0xff]
    %v1181 = vld [vmem:[%s7 + $0x20] sm:$0xff]
    %v1182 = vld [vmem:[%s7 + $0x28] sm:$0xff]
    %v1183 = vld [vmem:[%s7 + $0x30] sm:$0xff]
    %v1184 = vld [vmem:[%s7 + $0x38] sm:$0xff]
    %v1185 = vld [vmem:[%s7 + $0x40] sm:$0xff]
    %v1186 = vld [vmem:[%s7 + $0x48] sm:$0xff]
    %v1187 = vld [vmem:[%s7 + $0x50] sm:$0xff]
    %v1188 = vld [vmem:[%s7 + $0x58] sm:$0xff]
    %v1189 = vld [vmem:[%s7 + $0x60] sm:$0xff]
    %v1190 = vld [vmem:[%s7 + $0x68] sm:$0xff]
    %v1191 = vld [vmem:[%s7 + $0x70] sm:$0xff]
    %v1192 = vld [vmem:[%s7 + $0x78] sm:$0xff]
    %v1193 = vld [vmem:[%s7 + $0x80] sm:$0xff]
    %v1194 = vld [vmem:[%s7 + $0x88] sm:$0xff]
    %v1195 = vld [vmem:[%s7 + $0x90] sm:$0xff]
    %v1196 = vld [vmem:[%s7 + $0x98] sm:$0xff]
    %v1197 = vld [vmem:[%s7 + $0xa0] sm:$0xff]
    %v1198 = vld [vmem:[%s7 + $0xa8] sm:$0xff]
    %v1199 = vld [vmem:[%s7 + $0xb0] sm:$0xff]
    %v1200 = vld [vmem:[%s7 + $0xb8] sm:$0xff]
    %v1201 = vld [vmem:[%s7 + $0xc0] sm:$0xff]
    %v1202 = vld [vmem:[%s7 + $0xc8] sm:$0xff]
    %v1203 = vld [vmem:[%s7 + $0xd0] sm:$0xff]
    %v1204 = vld [vmem:[%s7 + $0xd8] sm:$0xff]
    %v1205 = vld [vmem:[%s7 + $0xe0] sm:$0xff]
    %v1206 = vld [vmem:[%s7 + $0xe8] sm:$0xff]
    %v1207 = vld [vmem:[%s7 + $0xf0] sm:$0xff]
    %v1208 = vld [vmem:[%s7 + $0xf8] sm:$0xff]
    %v1209 = vld [vmem:[%s8] sm:$0xf]
    %v1211 = vlaneseq
    %v1212 = vshrl.u32 %v1211, 7
    %v1213 = vsub.s32 0, %v1212
    %v1214 = vrot.slane %v1209, %v1213
    %v1215 = vlaneseq
    %v1216 = vshrl.u32 %v1215, 7
    %v1217 = vsub.s32 1, %v1216
    %v1218 = vrot.slane %v1209, %v1217
    %v1219 = vlaneseq
    %v1220 = vshrl.u32 %v1219, 7
    %v1221 = vsub.s32 2, %v1220
    %v1222 = vrot.slane %v1209, %v1221
    %v1223 = vlaneseq
    %v1224 = vshrl.u32 %v1223, 7
    %v1225 = vsub.s32 3, %v1224
    %v1226 = vrot.slane %v1209, %v1225
    %v1263 = vunpack.c.l.b16 %v1177
    %v1264 = vunpack.c.h.b16 %v1177
    %v1265 = vunpack.c.l.b16 %v1178
    %v1266 = vunpack.c.h.b16 %v1178
    %v1267 = vunpack.c.l.b16 %v1179
    %v1268 = vunpack.c.h.b16 %v1179
    %v1269 = vunpack.c.l.b16 %v1180
    %v1270 = vunpack.c.h.b16 %v1180
    %v1271 = vunpack.c.l.b16 %v1181
    %v1272 = vunpack.c.h.b16 %v1181
    %v1273 = vunpack.c.l.b16 %v1182
    %v1274 = vunpack.c.h.b16 %v1182
    %v1275 = vunpack.c.l.b16 %v1183
    %v1276 = vunpack.c.h.b16 %v1183
    %v1277 = vunpack.c.l.b16 %v1184
    %v1278 = vunpack.c.h.b16 %v1184
    %v1279 = vunpack.c.l.b16 %v1185
    %v1280 = vunpack.c.h.b16 %v1185
    %v1281 = vunpack.c.l.b16 %v1186
    %v1282 = vunpack.c.h.b16 %v1186
    %v1283 = vunpack.c.l.b16 %v1187
    %v1284 = vunpack.c.h.b16 %v1187
    %v1285 = vunpack.c.l.b16 %v1188
    %v1286 = vunpack.c.h.b16 %v1188
    %v1287 = vunpack.c.l.b16 %v1189
    %v1288 = vunpack.c.h.b16 %v1189
    %v1289 = vunpack.c.l.b16 %v1190
    %v1290 = vunpack.c.h.b16 %v1190
    %v1291 = vunpack.c.l.b16 %v1191
    %v1292 = vunpack.c.h.b16 %v1191
    %v1293 = vunpack.c.l.b16 %v1192
    %v1294 = vunpack.c.h.b16 %v1192
    %v1295 = vunpack.c.l.b16 %v1193
    %v1296 = vunpack.c.h.b16 %v1193
    %v1297 = vunpack.c.l.b16 %v1194
    %v1298 = vunpack.c.h.b16 %v1194
    %v1299 = vunpack.c.l.b16 %v1195
    %v1300 = vunpack.c.h.b16 %v1195
    %v1301 = vunpack.c.l.b16 %v1196
    %v1302 = vunpack.c.h.b16 %v1196
    %v1303 = vunpack.c.l.b16 %v1197
    %v1304 = vunpack.c.h.b16 %v1197
    %v1305 = vunpack.c.l.b16 %v1198
    %v1306 = vunpack.c.h.b16 %v1198
    %v1307 = vunpack.c.l.b16 %v1199
    %v1308 = vunpack.c.h.b16 %v1199
    %v1309 = vunpack.c.l.b16 %v1200
    %v1310 = vunpack.c.h.b16 %v1200
    %v1311 = vunpack.c.l.b16 %v1201
    %v1312 = vunpack.c.h.b16 %v1201
    %v1313 = vunpack.c.l.b16 %v1202
    %v1314 = vunpack.c.h.b16 %v1202
    %v1315 = vunpack.c.l.b16 %v1203
    %v1316 = vunpack.c.h.b16 %v1203
    %v1317 = vunpack.c.l.b16 %v1204
    %v1318 = vunpack.c.h.b16 %v1204
    %v1319 = vunpack.c.l.b16 %v1205
    %v1320 = vunpack.c.h.b16 %v1205
    %v1321 = vunpack.c.l.b16 %v1206
    %v1322 = vunpack.c.h.b16 %v1206
    %v1323 = vunpack.c.l.b16 %v1207
    %v1324 = vunpack.c.h.b16 %v1207
    %v1325 = vunpack.c.l.b16 %v1208
    %v1326 = vunpack.c.h.b16 %v1208
    %v1327 = vpack.c.b16 %v1267, %v1263
    %v1328 = vpack.c.b16 %v1268, %v1264
    %v1329 = vpack.c.b16 %v1269, %v1265
    %v1330 = vpack.c.b16 %v1270, %v1266
    %v1331 = vpack.c.b16 %v1275, %v1271
    %v1332 = vpack.c.b16 %v1276, %v1272
    %v1333 = vpack.c.b16 %v1277, %v1273
    %v1334 = vpack.c.b16 %v1278, %v1274
    %v1335 = vpack.c.b16 %v1283, %v1279
    %v1336 = vpack.c.b16 %v1284, %v1280
    %v1337 = vpack.c.b16 %v1285, %v1281
    %v1338 = vpack.c.b16 %v1286, %v1282
    %v1339 = vpack.c.b16 %v1291, %v1287
    %v1340 = vpack.c.b16 %v1292, %v1288
    %v1341 = vpack.c.b16 %v1293, %v1289
    %v1342 = vpack.c.b16 %v1294, %v1290
    %v1343 = vpack.c.b16 %v1299, %v1295
    %v1344 = vpack.c.b16 %v1300, %v1296
    %v1345 = vpack.c.b16 %v1301, %v1297
    %v1346 = vpack.c.b16 %v1302, %v1298
    %v1347 = vpack.c.b16 %v1307, %v1303
    %v1348 = vpack.c.b16 %v1308, %v1304
    %v1349 = vpack.c.b16 %v1309, %v1305
    %v1350 = vpack.c.b16 %v1310, %v1306
    %v1351 = vpack.c.b16 %v1315, %v1311
    %v1352 = vpack.c.b16 %v1316, %v1312
    %v1353 = vpack.c.b16 %v1317, %v1313
    %v1354 = vpack.c.b16 %v1318, %v1314
    %v1355 = vpack.c.b16 %v1323, %v1319
    %v1356 = vpack.c.b16 %v1324, %v1320
    %v1357 = vpack.c.b16 %v1325, %v1321
    %v1358 = vpack.c.b16 %v1326, %v1322
    %1391 = vmatprep.subr.bf16.mxu0 %v1328
    %1392 = vmatpush1.bf16.msra.mxu0 %v1327
    %1393 = vmatprep.subr.bf16.mxu0 %v1332
    %1394 = vmatpush1.bf16.msra.mxu0 %v1331
    %1395 = vmatprep.subr.bf16.mxu0 %v1336
    %1396 = vmatpush1.bf16.msra.mxu0 %v1335
    %1397 = vmatprep.subr.bf16.mxu0 %v1340
    %1398 = vmatpush1.bf16.msra.mxu0 %v1339
    %1399 = vmatprep.subr.bf16.mxu0 %v1344
    %1400 = vmatpush1.bf16.msra.mxu0 %v1343
    %1401 = vmatprep.subr.bf16.mxu0 %v1348
    %1402 = vmatpush1.bf16.msra.mxu0 %v1347
    %1403 = vmatprep.subr.bf16.mxu0 %v1352
    %1404 = vmatpush1.bf16.msra.mxu0 %v1351
    %1405 = vmatprep.subr.bf16.mxu0 %v1356
    %1406 = vmatpush1.bf16.msra.mxu0 %v1355
    %1407 = vmatprep.subr.bf16.mxu0 0
    %1408 = vmatpush1.bf16.msra.mxu0 0
    %1409 = vmatprep.subr.bf16.mxu0 0
    %1410 = vmatpush1.bf16.msra.mxu0 0
    %1411 = vmatprep.subr.bf16.mxu0 0
    %1412 = vmatpush1.bf16.msra.mxu0 0
    %1413 = vmatprep.subr.bf16.mxu0 0
    %1414 = vmatpush1.bf16.msra.mxu0 0
    %1415 = vmatprep.subr.bf16.mxu0 0
    %1416 = vmatpush1.bf16.msra.mxu0 0
    %1417 = vmatprep.subr.bf16.mxu0 0
    %1418 = vmatpush1.bf16.msra.mxu0 0
    %1419 = vmatprep.subr.bf16.mxu0 0
    %1420 = vmatpush1.bf16.msra.mxu0 0
    %1421 = vmatprep.subr.bf16.mxu0 0
    %1422 = vmatpush1.bf16.msra.mxu0 0
    %1423 = vmatprep.mubr.bf16.mxu0 0
    %1424 = vmatmul.mubr.bf16.gmra.mrb[0].mxu0 %v1176
    %v1425 = vpop.f32.mrb[0].mxu0
    %v1426 = vadd.f32 %v1214, %v1425
    %v1427 = vpop.f32.mrb[0].mxu0
    %v1428 = vadd.f32 %v1218, %v1427
    %v1429 = vpop.f32.mrb[0].mxu0
    %v1430 = vpop.f32.mrb[0].mxu0
    %1431 = vdwg.mxu0
    %1432 = vmatprep.subr.bf16.mxu0 %v1330
    %1433 = vmatpush1.bf16.msra.mxu0 %v1329
    %1434 = vmatprep.subr.bf16.mxu0 %v1334
    %1435 = vmatpush1.bf16.msra.mxu0 %v1333
    %1436 = vmatprep.subr.bf16.mxu0 %v1338
    %1437 = vmatpush1.bf16.msra.mxu0 %v1337
    %1438 = vmatprep.subr.bf16.mxu0 %v1342
    %1439 = vmatpush1.bf16.msra.mxu0 %v1341
    %1440 = vmatprep.subr.bf16.mxu0 %v1346
    %1441 = vmatpush1.bf16.msra.mxu0 %v1345
    %1442 = vmatprep.subr.bf16.mxu0 %v1350
    %1443 = vmatpush1.bf16.msra.mxu0 %v1349
    %1444 = vmatprep.subr.bf16.mxu0 %v1354
    %1445 = vmatpush1.bf16.msra.mxu0 %v1353
    %1446 = vmatprep.subr.bf16.mxu0 %v1358
    %1447 = vmatpush1.bf16.msra.mxu0 %v1357
    %1448 = vmatprep.subr.bf16.mxu0 0
    %1449 = vmatpush1.bf16.msra.mxu0 0
    %1450 = vmatprep.subr.bf16.mxu0 0
    %1451 = vmatpush1.bf16.msra.mxu0 0
    %1452 = vmatprep.subr.bf16.mxu0 0
    %1453 = vmatpush1.bf16.msra.mxu0 0
    %1454 = vmatprep.subr.bf16.mxu0 0
    %1455 = vmatpush1.bf16.msra.mxu0 0
    %1456 = vmatprep.subr.bf16.mxu0 0
    %1457 = vmatpush1.bf16.msra.mxu0 0
    %1458 = vmatprep.subr.bf16.mxu0 0
    %1459 = vmatpush1.bf16.msra.mxu0 0
    %1460 = vmatprep.subr.bf16.mxu0 0
    %1461 = vmatpush1.bf16.msra.mxu0 0
    %1462 = vmatprep.subr.bf16.mxu0 0
    %1463 = vmatpush1.bf16.msra.mxu0 0
    %1464 = vmatprep.mubr.bf16.mxu0 0
    %1465 = vmatmul.mubr.bf16.gmra.mrb[0].mxu0 %v1176
    %v1466 = vpop.f32.mrb[0].mxu0
    %v1467 = vadd.f32 %v1222, %v1466
    %v1468 = vpop.f32.mrb[0].mxu0
    %v1469 = vadd.f32 %v1226, %v1468
    %v1470 = vpop.f32.mrb[0].mxu0
    %v1471 = vpop.f32.mrb[0].mxu0
    %1472 = vdwg.mxu0
    %vm1473 = vcmp.gt.f32.partialorder %v1426, 0.0
    %vm1474 = vcmp.gt.f32.partialorder %v1428, 0.0
    %vm1475 = vcmp.gt.f32.partialorder %v1467, 0.0
    %vm1476 = vcmp.gt.f32.partialorder %v1469, 0.0
    %v1477 = vmul.f32 %v1426, 0.01
    %v1478 = vmul.f32 %v1428, 0.01
    %v1479 = vmul.f32 %v1467, 0.01
    %v1480 = vmul.f32 %v1469, 0.01
    %v1481 = vsel %vm1473, %v1426, %v1477
    %v1482 = vsel %vm1474, %v1428, %v1478
    %v1483 = vsel %vm1475, %v1467, %v1479
    %v1484 = vsel %vm1476, %v1469, %v1480
    %v1485 = vpack.c.bf16 %v1481, %v1481
    %v1486 = vpack.c.bf16 %v1482, %v1482
    %v1487 = vpack.c.bf16 %v1483, %v1483
    %v1488 = vpack.c.bf16 %v1484, %v1484
    %v1489 = vld [vmem:[%s9] sm:$0xf]
    %v1490 = vld [vmem:[%s9 + $0x4] sm:$0xf]
    %v1491 = vld [vmem:[%s9 + $0x8] sm:$0xf]
    %v1492 = vld [vmem:[%s9 + $0xc] sm:$0xf]
    %v1493 = vld [vmem:[%s9 + $0x10] sm:$0xf]
    %v1494 = vld [vmem:[%s9 + $0x14] sm:$0xf]
    %v1495 = vld [vmem:[%s9 + $0x18] sm:$0xf]
    %v1496 = vld [vmem:[%s9 + $0x1c] sm:$0xf]
    %v1497 = vld [vmem:[%s9 + $0x20] sm:$0xf]
    %v1498 = vld [vmem:[%s9 + $0x24] sm:$0xf]
    %v1499 = vld [vmem:[%s9 + $0x28] sm:$0xf]
    %v1500 = vld [vmem:[%s9 + $0x2c] sm:$0xf]
    %v1501 = vld [vmem:[%s9 + $0x30] sm:$0xf]
    %v1502 = vld [vmem:[%s9 + $0x34] sm:$0xf]
    %v1503 = vld [vmem:[%s9 + $0x38] sm:$0xf]
    %v1504 = vld [vmem:[%s9 + $0x3c] sm:$0xf]
    %v1505 = vld [vmem:[%s9 + $0x40] sm:$0xf]
    %v1506 = vld [vmem:[%s9 + $0x44] sm:$0xf]
    %v1507 = vld [vmem:[%s9 + $0x48] sm:$0xf]
    %v1508 = vld [vmem:[%s9 + $0x4c] sm:$0xf]
    %v1509 = vld [vmem:[%s9 + $0x50] sm:$0xf]
    %v1510 = vld [vmem:[%s9 + $0x54] sm:$0xf]
    %v1511 = vld [vmem:[%s9 + $0x58] sm:$0xf]
    %v1512 = vld [vmem:[%s9 + $0x5c] sm:$0xf]
    %v1513 = vld [vmem:[%s9 + $0x60] sm:$0xf]
    %v1514 = vld [vmem:[%s9 + $0x64] sm:$0xf]
    %v1515 = vld [vmem:[%s9 + $0x68] sm:$0xf]
    %v1516 = vld [vmem:[%s9 + $0x6c] sm:$0xf]
    %v1517 = vld [vmem:[%s9 + $0x70] sm:$0xf]
    %v1518 = vld [vmem:[%s9 + $0x74] sm:$0xf]
    %v1519 = vld [vmem:[%s9 + $0x78] sm:$0xf]
    %v1520 = vld [vmem:[%s9 + $0x7c] sm:$0xf]
    %v1521 = vld [vmem:[%s9 + $0x80] sm:$0xf]
    %v1522 = vld [vmem:[%s9 + $0x84] sm:$0xf]
    %v1523 = vld [vmem:[%s9 + $0x88] sm:$0xf]
    %v1524 = vld [vmem:[%s9 + $0x8c] sm:$0xf]
    %v1525 = vld [vmem:[%s9 + $0x90] sm:$0xf]
    %v1526 = vld [vmem:[%s9 + $0x94] sm:$0xf]
    %v1527 = vld [vmem:[%s9 + $0x98] sm:$0xf]
    %v1528 = vld [vmem:[%s9 + $0x9c] sm:$0xf]
    %v1529 = vld [vmem:[%s9 + $0xa0] sm:$0xf]
    %v1530 = vld [vmem:[%s9 + $0xa4] sm:$0xf]
    %v1531 = vld [vmem:[%s9 + $0xa8] sm:$0xf]
    %v1532 = vld [vmem:[%s9 + $0xac] sm:$0xf]
    %v1533 = vld [vmem:[%s9 + $0xb0] sm:$0xf]
    %v1534 = vld [vmem:[%s9 + $0xb4] sm:$0xf]
    %v1535 = vld [vmem:[%s9 + $0xb8] sm:$0xf]
    %v1536 = vld [vmem:[%s9 + $0xbc] sm:$0xf]
    %v1537 = vld [vmem:[%s9 + $0xc0] sm:$0xf]
    %v1538 = vld [vmem:[%s9 + $0xc4] sm:$0xf]
    %v1539 = vld [vmem:[%s9 + $0xc8] sm:$0xf]
    %v1540 = vld [vmem:[%s9 + $0xcc] sm:$0xf]
    %v1541 = vld [vmem:[%s9 + $0xd0] sm:$0xf]
    %v1542 = vld [vmem:[%s9 + $0xd4] sm:$0xf]
    %v1543 = vld [vmem:[%s9 + $0xd8] sm:$0xf]
    %v1544 = vld [vmem:[%s9 + $0xdc] sm:$0xf]
    %v1545 = vld [vmem:[%s9 + $0xe0] sm:$0xf]
    %v1546 = vld [vmem:[%s9 + $0xe4] sm:$0xf]
    %v1547 = vld [vmem:[%s9 + $0xe8] sm:$0xf]
    %v1548 = vld [vmem:[%s9 + $0xec] sm:$0xf]
    %v1549 = vld [vmem:[%s9 + $0xf0] sm:$0xf]
    %v1550 = vld [vmem:[%s9 + $0xf4] sm:$0xf]
    %v1551 = vld [vmem:[%s9 + $0xf8] sm:$0xf]
    %v1552 = vld [vmem:[%s9 + $0xfc] sm:$0xf]
    %v1553 = vld [vmem:[%s10] sm:$0x1]
    %v1555 = vlaneseq
    %v1556 = vshrl.u32 %v1555, 7
    %v1557 = vsub.s32 0, %v1556
    %v1558 = vrot.slane %v1553, %v1557
    %v1624 = vunpack.c.l.b16 %v1489
    %v1625 = vunpack.c.l.b16 %v1490
    %v1626 = vunpack.c.l.b16 %v1491
    %v1627 = vunpack.c.l.b16 %v1492
    %v1628 = vunpack.c.l.b16 %v1493
    %v1629 = vunpack.c.l.b16 %v1494
    %v1630 = vunpack.c.l.b16 %v1495
    %v1631 = vunpack.c.l.b16 %v1496
    %v1632 = vunpack.c.l.b16 %v1497
    %v1633 = vunpack.c.l.b16 %v1498
    %v1634 = vunpack.c.l.b16 %v1499
    %v1635 = vunpack.c.l.b16 %v1500
    %v1636 = vunpack.c.l.b16 %v1501
    %v1637 = vunpack.c.l.b16 %v1502
    %v1638 = vunpack.c.l.b16 %v1503
    %v1639 = vunpack.c.l.b16 %v1504
    %v1640 = vunpack.c.l.b16 %v1505
    %v1641 = vunpack.c.l.b16 %v1506
    %v1642 = vunpack.c.l.b16 %v1507
    %v1643 = vunpack.c.l.b16 %v1508
    %v1644 = vunpack.c.l.b16 %v1509
    %v1645 = vunpack.c.l.b16 %v1510
    %v1646 = vunpack.c.l.b16 %v1511
    %v1647 = vunpack.c.l.b16 %v1512
    %v1648 = vunpack.c.l.b16 %v1513
    %v1649 = vunpack.c.l.b16 %v1514
    %v1650 = vunpack.c.l.b16 %v1515
    %v1651 = vunpack.c.l.b16 %v1516
    %v1652 = vunpack.c.l.b16 %v1517
    %v1653 = vunpack.c.l.b16 %v1518
    %v1654 = vunpack.c.l.b16 %v1519
    %v1655 = vunpack.c.l.b16 %v1520
    %v1656 = vunpack.c.l.b16 %v1521
    %v1657 = vunpack.c.l.b16 %v1522
    %v1658 = vunpack.c.l.b16 %v1523
    %v1659 = vunpack.c.l.b16 %v1524
    %v1660 = vunpack.c.l.b16 %v1525
    %v1661 = vunpack.c.l.b16 %v1526
    %v1662 = vunpack.c.l.b16 %v1527
    %v1663 = vunpack.c.l.b16 %v1528
    %v1664 = vunpack.c.l.b16 %v1529
    %v1665 = vunpack.c.l.b16 %v1530
    %v1666 = vunpack.c.l.b16 %v1531
    %v1667 = vunpack.c.l.b16 %v1532
    %v1668 = vunpack.c.l.b16 %v1533
    %v1669 = vunpack.c.l.b16 %v1534
    %v1670 = vunpack.c.l.b16 %v1535
    %v1671 = vunpack.c.l.b16 %v1536
    %v1672 = vunpack.c.l.b16 %v1537
    %v1673 = vunpack.c.l.b16 %v1538
    %v1674 = vunpack.c.l.b16 %v1539
    %v1675 = vunpack.c.l.b16 %v1540
    %v1676 = vunpack.c.l.b16 %v1541
    %v1677 = vunpack.c.l.b16 %v1542
    %v1678 = vunpack.c.l.b16 %v1543
    %v1679 = vunpack.c.l.b16 %v1544
    %v1680 = vunpack.c.l.b16 %v1545
    %v1681 = vunpack.c.l.b16 %v1546
    %v1682 = vunpack.c.l.b16 %v1547
    %v1683 = vunpack.c.l.b16 %v1548
    %v1684 = vunpack.c.l.b16 %v1549
    %v1685 = vunpack.c.l.b16 %v1550
    %v1686 = vunpack.c.l.b16 %v1551
    %v1687 = vunpack.c.l.b16 %v1552
    %v1688 = vpack.c.b16 %v1625, %v1624
    %v1689 = vpack.c.b16 %v1627, %v1626
    %v1690 = vpack.c.b16 %v1629, %v1628
    %v1691 = vpack.c.b16 %v1631, %v1630
    %v1692 = vpack.c.b16 %v1633, %v1632
    %v1693 = vpack.c.b16 %v1635, %v1634
    %v1694 = vpack.c.b16 %v1637, %v1636
    %v1695 = vpack.c.b16 %v1639, %v1638
    %v1696 = vpack.c.b16 %v1641, %v1640
    %v1697 = vpack.c.b16 %v1643, %v1642
    %v1698 = vpack.c.b16 %v1645, %v1644
    %v1699 = vpack.c.b16 %v1647, %v1646
    %v1700 = vpack.c.b16 %v1649, %v1648
    %v1701 = vpack.c.b16 %v1651, %v1650
    %v1702 = vpack.c.b16 %v1653, %v1652
    %v1703 = vpack.c.b16 %v1655, %v1654
    %v1704 = vpack.c.b16 %v1657, %v1656
    %v1705 = vpack.c.b16 %v1659, %v1658
    %v1706 = vpack.c.b16 %v1661, %v1660
    %v1707 = vpack.c.b16 %v1663, %v1662
    %v1708 = vpack.c.b16 %v1665, %v1664
    %v1709 = vpack.c.b16 %v1667, %v1666
    %v1710 = vpack.c.b16 %v1669, %v1668
    %v1711 = vpack.c.b16 %v1671, %v1670
    %v1712 = vpack.c.b16 %v1673, %v1672
    %v1713 = vpack.c.b16 %v1675, %v1674
    %v1714 = vpack.c.b16 %v1677, %v1676
    %v1715 = vpack.c.b16 %v1679, %v1678
    %v1716 = vpack.c.b16 %v1681, %v1680
    %v1717 = vpack.c.b16 %v1683, %v1682
    %v1718 = vpack.c.b16 %v1685, %v1684
    %v1719 = vpack.c.b16 %v1687, %v1686
    %1752 = vmatprep.subr.bf16.mxu0 0
    %1753 = vmatpush1.bf16.msra.mxu0 %v1688
    %1754 = vmatprep.subr.bf16.mxu0 0
    %1755 = vmatpush1.bf16.msra.mxu0 %v1689
    %1756 = vmatprep.subr.bf16.mxu0 0
    %1757 = vmatpush1.bf16.msra.mxu0 %v1690
    %1758 = vmatprep.subr.bf16.mxu0 0
    %1759 = vmatpush1.bf16.msra.mxu0 %v1691
    %1760 = vmatprep.subr.bf16.mxu0 0
    %1761 = vmatpush1.bf16.msra.mxu0 %v1692
    %1762 = vmatprep.subr.bf16.mxu0 0
    %1763 = vmatpush1.bf16.msra.mxu0 %v1693
    %1764 = vmatprep.subr.bf16.mxu0 0
    %1765 = vmatpush1.bf16.msra.mxu0 %v1694
    %1766 = vmatprep.subr.bf16.mxu0 0
    %1767 = vmatpush1.bf16.msra.mxu0 %v1695
    %1768 = vmatprep.subr.bf16.mxu0 0
    %1769 = vmatpush1.bf16.msra.mxu0 %v1696
    %1770 = vmatprep.subr.bf16.mxu0 0
    %1771 = vmatpush1.bf16.msra.mxu0 %v1697
    %1772 = vmatprep.subr.bf16.mxu0 0
    %1773 = vmatpush1.bf16.msra.mxu0 %v1698
    %1774 = vmatprep.subr.bf16.mxu0 0
    %1775 = vmatpush1.bf16.msra.mxu0 %v1699
    %1776 = vmatprep.subr.bf16.mxu0 0
    %1777 = vmatpush1.bf16.msra.mxu0 %v1700
    %1778 = vmatprep.subr.bf16.mxu0 0
    %1779 = vmatpush1.bf16.msra.mxu0 %v1701
    %1780 = vmatprep.subr.bf16.mxu0 0
    %1781 = vmatpush1.bf16.msra.mxu0 %v1702
    %1782 = vmatprep.subr.bf16.mxu0 0
    %1783 = vmatpush1.bf16.msra.mxu0 %v1703
    %1784 = vmatprep.mubr.bf16.mxu0 %v1486
    %1785 = vmatmul.mubr.bf16.gmra.mrb[0].mxu0 %v1485
    %v1786 = vpop.f32.mrb[0].mxu0
    %v1787 = vadd.f32 %v1558, %v1786
    %v1788 = vpop.f32.mrb[0].mxu0
    %v1789 = vpop.f32.mrb[0].mxu0
    %v1790 = vpop.f32.mrb[0].mxu0
    %1791 = vdwg.mxu0
    %1792 = vmatprep.subr.bf16.mxu0 0
    %1793 = vmatpush1.bf16.msra.mxu0 %v1704
    %1794 = vmatprep.subr.bf16.mxu0 0
    %1795 = vmatpush1.bf16.msra.mxu0 %v1705
    %1796 = vmatprep.subr.bf16.mxu0 0
    %1797 = vmatpush1.bf16.msra.mxu0 %v1706
    %1798 = vmatprep.subr.bf16.mxu0 0
    %1799 = vmatpush1.bf16.msra.mxu0 %v1707
    %1800 = vmatprep.subr.bf16.mxu0 0
    %1801 = vmatpush1.bf16.msra.mxu0 %v1708
    %1802 = vmatprep.subr.bf16.mxu0 0
    %1803 = vmatpush1.bf16.msra.mxu0 %v1709
    %1804 = vmatprep.subr.bf16.mxu0 0
    %1805 = vmatpush1.bf16.msra.mxu0 %v1710
    %1806 = vmatprep.subr.bf16.mxu0 0
    %1807 = vmatpush1.bf16.msra.mxu0 %v1711
    %1808 = vmatprep.subr.bf16.mxu0 0
    %1809 = vmatpush1.bf16.msra.mxu0 %v1712
    %1810 = vmatprep.subr.bf16.mxu0 0
    %1811 = vmatpush1.bf16.msra.mxu0 %v1713
    %1812 = vmatprep.subr.bf16.mxu0 0
    %1813 = vmatpush1.bf16.msra.mxu0 %v1714
    %1814 = vmatprep.subr.bf16.mxu0 0
    %1815 = vmatpush1.bf16.msra.mxu0 %v1715
    %1816 = vmatprep.subr.bf16.mxu0 0
    %1817 = vmatpush1.bf16.msra.mxu0 %v1716
    %1818 = vmatprep.subr.bf16.mxu0 0
    %1819 = vmatpush1.bf16.msra.mxu0 %v1717
    %1820 = vmatprep.subr.bf16.mxu0 0
    %1821 = vmatpush1.bf16.msra.mxu0 %v1718
    %1822 = vmatprep.subr.bf16.mxu0 0
    %1823 = vmatpush1.bf16.msra.mxu0 %v1719
    %1824 = vmatprep.mubr.bf16.mxu0 %v1488
    %1825 = vmatmul.mubr.bf16.gmra.mrb[0].mxu0 %v1487
    %v1826 = vpop.f32.mrb[0].mxu0
    %v1827 = vadd.f32 %v1787, %v1826
    %v1828 = vpop.f32.mrb[0].mxu0
    %v1829 = vpop.f32.mrb[0].mxu0
    %v1830 = vpop.f32.mrb[0].mxu0
    %1831 = vdwg.mxu0
    %1833 = vrot.lane.b32.xlu0 %v1827, 127
    %v1834 = vpop.permute.xlu0 %1833
    %vm1836 = vcmask 41984
    %v1837 = vsel %vm1836, %v1834, 0.0
    %1838 = vadd.xlane.f32.xlu0 %v1837
    %v1839 = vpop.xlane.xlu0 %1838
    %v1840 = vrot.slane %v1839, 4
    %v1841 = vadd.f32 %v1839, %v1840
    %v1842 = vrot.slane %v1841, 2
    %v1843 = vadd.f32 %v1841, %v1842
    %v1844 = vrot.slane %v1843, 1
    %v1845 = vadd.f32 %v1843, %v1844
    %s1846 = vtos %v1845
    %v1847 = vrcp.pop 12.0
    %s1848 = vtos %v1847
    %s1849 = smul.f32 %s1846, %s1848
    %v1850 = vstv %s1849
    %v1851 = vsub.f32 %v1827, %v1850
    %1852 = vset.pattern.permute.xlu0 0
    %1853 = vperm.xlu0 %1852, %v1827
    %v1854 = vpop.permute.xlu0 %1853
    %v1856 = vadd.f32 %v1854, %v1851
    %1858 = vrot.lane.b32.xlu0 %v1856, 127
    %v1859 = vpop.permute.xlu0 %1858
    %1861 = vst.msk [vmem:[#allocation2] sm:$0x3] %vm1836, %v1859
    // Predicated region
    $region46: #{dueling_forward.1} parent=1 // pred_check
      _
    $region47: #{dueling_forward.1} parent=1 // pred_check_branch
      %1863 = sbr.rel (0) target = $region49
    $region48: #{dueling_forward.1} parent=1 // pred_region
      %s1865 = ssub.s32 32, 32
      %1866 = vsyncadd [#allocation3], %s1865
      %s1868 = sshll.u32 [#allocation2], 4
      %s1869 = int_to_ptr.vmem [resolvable:$true] %s1868
      %1871 = dma.vmem_to_hbm [thread:$0]  %s1869, 32, %s11, [#allocation3]
    $region49: #{dueling_forward.1} parent=1 // pred_fallthru
      _
    // Predicated region
    $region50: #{dueling_forward.1} parent=1 // pred_check
      _
    $region51: #{dueling_forward.1} parent=1 // pred_check_branch
      %1873 = sbr.rel (0) target = $region53
    $region52: #{dueling_forward.1} parent=1 // pred_region
      %1874 = dma.done [#allocation3], 32
    $region53: #{dueling_forward.1} parent=1 // pred_fallthru
      _
    %1875 = vsyncpa [#allocation3], 1

</llo_original>
